<compile_context>
chip_gen: v7x
topology: tpu7x:2x2x1
jax: 0.10.0
libtpu: 0.0.40
codegen_flags: <defaults>
</compile_context>

<pallas_src>
import jax
import jax.numpy as jnp
from jax import lax
from jax.experimental import pallas as pl
from jax.experimental.pallas import tpu as pltpu


# --------------------- kernel 1: attention + stacked LSTM -------------------

def _make_recurrent_step_kernel(num_layers, emb_dim, enc_dim, hidden_dim,
                                attn_dim, src_len, batch):
    L, EMB, E, H, A, S, B = (num_layers, emb_dim, enc_dim, hidden_dim,
                             attn_dim, src_len, batch)
    n_lstm = 4 + 3 * (L - 1)

    def kernel(*refs):
        (emb_ref, h0_ref, c0_ref, enc_ref, eproj_ref, bias_ref,
         wah_ref, v_ref) = refs[:8]
        lstm_refs = refs[8:8 + n_lstm]
        h_out_ref, c_out_ref, attn_ref, ctx_ref = refs[8 + n_lstm:]

        f32, bf16 = jnp.float32, jnp.bfloat16

        x_emb = emb_ref[...]                                    # (B, EMB) f32
        h_top = h0_ref[L - 1]                                   # (B, H)   f32

        # ---------------- additive attention (lane-dense tail) ----------------
        # hproj depends on the previous hidden state -> must stay per-step.
        hproj = jnp.dot(h_top.astype(bf16), wah_ref[...],
                        preferred_element_type=f32)             # (B, A)
        hproj3 = lax.broadcast_in_dim(hproj, (B, S, A), (0, 2))  # (B, S, A)
        # eproj already contains enc @ Wa_e + ba (precomputed, step-invariant).
        energy = jnp.tanh(eproj_ref[...] + hproj3)              # (B, S, A)
        scores = jnp.sum(energy * v_ref[...], axis=-1)          # (B, S) lane reduce
        scores = scores + bias_ref[...]                         # additive mask bias
        m = jnp.max(scores, axis=-1, keepdims=True)             # (B, 1)
        e = jnp.exp(scores - m)
        denom = jnp.sum(e, axis=-1, keepdims=True)              # (B, 1)
        attn = e * pl.reciprocal(denom, approx=True)            # (B, S) lane-dense
        attn_ref[...] = attn

        # context[b] = attn[b] @ enc[b] : per-b (1,S)@(S,E) MXU dot (B is tiny
        # and static at decode), bf16 operands, f32 accumulation.
        ctx_rows = []
        for b in range(B):
            a_row = attn[b:b + 1, :].astype(bf16)               # (1, S)
            ctx_rows.append(jnp.dot(a_row, enc_ref[b],
                                    preferred_element_type=f32))  # (1, E)
        ctx = jnp.concatenate(ctx_rows, axis=0)                 # (B, E) f32
        ctx_ref[...] = ctx
        ctx_b16 = ctx.astype(bf16)

        # ---------------- single-step stacked LSTM ----------------
        # PyTorch nn.LSTM gate order [i, f, g, o]; b = b_ih + b_hh folded.
        x = x_emb
        idx = 0
        for l in range(L):
            h_prev = h0_ref[l]                                  # (B, H) f32
            c_prev = c0_ref[l]                                  # (B, H) f32
            if l == 0:
                # lstm_input = [embedded ; context]: Wih pre-split in the
                # wrapper (no in-kernel concat / weight slicing).
                wih_e, wih_c = lstm_refs[idx], lstm_refs[idx + 1]
                whh, b_r = lstm_refs[idx + 2], lstm_refs[idx + 3]
                idx += 4
                gates = (jnp.dot(x_emb.astype(bf16), wih_e[...],
                                 preferred_element_type=f32)
                         + jnp.dot(ctx_b16, wih_c[...],
                                   preferred_element_type=f32))
            else:
                wih, whh, b_r = (lstm_refs[idx], lstm_refs[idx + 1],
                                 lstm_refs[idx + 2])
                idx += 3
                gates = jnp.dot(x.astype(bf16), wih[...],
                                preferred_element_type=f32)
            gates = (gates
                     + jnp.dot(h_prev.astype(bf16), whh[...],
                               preferred_element_type=f32)
                     + b_r[...])                                # (B, 4H) f32
            # f32 gate math (v5e has no bf16 VPU/EUP); at production sizes H
            # is a multiple of 128 so these lane slices are vreg-aligned.
            ig = jax.nn.sigmoid(gates[:, 0 * H:1 * H])
            fg = jax.nn.sigmoid(gates[:, 1 * H:2 * H])
            gg = jnp.tanh(gates[:, 2 * H:3 * H])
            og = jax.nn.sigmoid(gates[:, 3 * H:4 * H])
            c_new = fg * c_prev + ig * gg
            h_new = og * jnp.tanh(c_new)
            h_out_ref[l] = h_new
            c_out_ref[l] = c_new
            x = h_new          # inter-layer dropout = identity (eval mode)

    return kernel


# --------------------- kernel 2: vocab-tiled output projection --------------

def _proj_kernel(feat_ref, w_ref, b_ref, out_ref):
    out_ref[...] = (jnp.dot(feat_ref[...], w_ref[...],
                            preferred_element_type=jnp.float32)
                    + b_ref[...])


# ------------------------------ weight / encoder prep -----------------------

def prepare_decoder_weights(params):
    """Step-invariant prep: bf16 MXU operands, layer-0 Wih split. Do ONCE."""
    bf16 = jnp.bfloat16
    emb_dim = params['emb'].shape[1]
    prepared = {
        'emb': params['emb'],
        'Wa_h': params['Wa_h'].astype(bf16),
        'Wa_e': params['Wa_e'],               # f32: used only in eproj precompute
        'ba': params['ba'],
        'v3': params['v'].reshape(1, 1, -1),  # (1,1,A) f32
        'Wout': params['Wout'].astype(bf16),
        'bout': params['bout'],
    }
    lstm_flat = []
    for l, layer in enumerate(params['lstm']):
        if l == 0:
            lstm_flat += [layer['Wih'][:emb_dim].astype(bf16),
                          layer['Wih'][emb_dim:].astype(bf16)]
        else:
            lstm_flat += [layer['Wih'].astype(bf16)]
        lstm_flat += [layer['Whh'].astype(bf16), layer['b']]
    prepared['lstm_flat'] = tuple(lstm_flat)
    return prepared


def precompute_encoder(prepared, encoder_outputs, encoder_mask):
    """Per-source-sequence (step-invariant) precompute, hoisted out of the
    decode step: encoder projection + attention bias + bf16 encoder copy."""
    eproj = (jnp.einsum('bse,ea->bsa', encoder_outputs, prepared['Wa_e'])
             + prepared['ba'][None])                            # (B,S,A) f32
    bias = jnp.where(encoder_mask > 0, 0.0, -1e10).astype(jnp.float32)  # (B,S)
    enc_b16 = encoder_outputs.astype(jnp.bfloat16)              # (B,S,E)
    return enc_b16, eproj, bias


# ------------------------------ step wrapper --------------------------------

def decoder_step_pallas(prepared, embedded, h0, c0, enc_b16, eproj, bias):
    L, B, H = h0.shape
    _, S, E = enc_b16.shape
    EMB = embedded.shape[1]
    A = prepared['Wa_h'].shape[1]
    K_out, V = prepared['Wout'].shape
    assert K_out == H + E + EMB
    lstm_flat = prepared['lstm_flat']

    # ---- recurrent step: attention + LSTM (small, VMEM-resident) ----
    kernel = _make_recurrent_step_kernel(L, EMB, E, H, A, S, B)
    rec_flops = int(2 * B * H * A + 4 * B * S * A + 2 * B * S * E
                    + 2 * B * (EMB + E + H) * 4 * H
                    + 2 * B * 2 * H * 4 * H * max(L - 1, 0))
    rec_bytes = int(sum(int(x.size) * x.dtype.itemsize
                        for x in (embedded, h0, c0, enc_b16, eproj, bias,
                                  prepared['Wa_h'], prepared['v3']))
                    + sum(int(x.size) * x.dtype.itemsize for x in lstm_flat)
                    + 2 * L * B * H * 4 + B * S * 4 + B * E * 4)
    h_new, c_new, attn, ctx = pl.pallas_call(
        kernel,
        out_shape=(
            jax.ShapeDtypeStruct((L, B, H), jnp.float32),   # new hidden state
            jax.ShapeDtypeStruct((L, B, H), jnp.float32),   # new cell state
            jax.ShapeDtypeStruct((B, S), jnp.float32),      # attention (lane-dense)
            jax.ShapeDtypeStruct((B, E), jnp.float32),      # context
        ),
        compiler_params=pltpu.CompilerParams(vmem_limit_bytes=32 * 1024 * 1024),
        cost_estimate=pl.CostEstimate(
            flops=rec_flops,
            transcendentals=int(B * S * A + 5 * B * H * L),
            bytes_accessed=rec_bytes),
    )(embedded, h0, c0, enc_b16, eproj, bias,
      prepared['Wa_h'], prepared['v3'], *lstm_flat)

    # ---- output projection: vocab-tiled grid, bf16 MXU, megacore-parallel ----
    feat = jnp.concatenate([h_new[L - 1], ctx, embedded],
                           axis=1).astype(jnp.bfloat16)         # (B, K)
    K = H + E + EMB
    tile_v = next((t for t in (512, 256, 128) if V % t == 0), V)
    grid = (V // tile_v,)
    pred = pl.pallas_call(
        _proj_kernel,
        out_shape=jax.ShapeDtypeStruct((B, V), jnp.float32),
        grid=grid,
        in_specs=[
            pl.BlockSpec((B, K), lambda j: (0, 0)),             # feat (resident)
            pl.BlockSpec((K, tile_v), lambda j: (0, j)),        # Wout tile (bf16)
            pl.BlockSpec((1, tile_v), lambda j: (0, j)),        # bias tile
        ],
        out_specs=pl.BlockSpec((B, tile_v), lambda j: (0, j)),  # lane-dense pred
        compiler_params=pltpu.CompilerParams(
            dimension_semantics=("parallel",),                  # v7x: 2 TCs split V
            vmem_limit_bytes=32 * 1024 * 1024),
        cost_estimate=pl.CostEstimate(
            flops=int(2 * B * K * V),
            transcendentals=0,
            bytes_accessed=int(K * V * 2 + B * K * 2 + V * 4 + B * V * 4)),
    )(feat, prepared['Wout'], prepared['bout'])
    return pred, h_new, c_new, attn


def decoder_forward(params, tokens, hidden, encoder_outputs, encoder_mask,
                    prepared=None, enc_cache=None):
    """Pallas implementation of Decoder.forward (eval mode: dropout = identity).

    `prepared` (bf16 weights) and `enc_cache` (encoder projection / mask bias)
    are step-invariant — pass them explicitly in a decode loop to avoid
    recomputing them every token.
    """
    h0, c0 = hidden
    if prepared is None:
        prepared = prepare_decoder_weights(params)
    if enc_cache is None:
        enc_cache = precompute_encoder(prepared, encoder_outputs, encoder_mask)
    enc_b16, eproj, bias = enc_cache
    # Embedding lookup (gather) stays in plain JAX (glue).
    # TODO(synk): nn.Dropout is stochastic; treated as identity (eval mode).
    embedded = jnp.take(params['emb'], tokens[:, 0], axis=0)    # (B, EMB) f32
    pred, h_new, c_new, attn = decoder_step_pallas(
        prepared, embedded, h0, c0, enc_b16, eproj, bias)
    return pred, (h_new, c_new), attn


# ------------------------------ parameters ----------------------------------

def init_decoder_params(key, vocab_size, embedding_dim, hidden_dim, num_layers,
                        attention_dim, encoder_hidden_dim):
    ks = jax.random.split(key, 8 + num_layers)
    s = 0.1
    p = {}
    p['emb'] = jax.random.normal(ks[0], (vocab_size, embedding_dim), jnp.float32) * s
    # attention: Linear(hidden_dim + encoder_hidden_dim -> attention_dim) split
    # into hidden / encoder halves, plus v: Linear(attention_dim -> 1, no bias)
    p['Wa_h'] = jax.random.normal(ks[1], (hidden_dim, attention_dim), jnp.float32) * s
    p['Wa_e'] = jax.random.normal(ks[2], (encoder_hidden_dim, attention_dim), jnp.float32) * s
    p['ba'] = jax.random.normal(ks[3], (1, attention_dim), jnp.float32) * s
    p['v'] = jax.random.normal(ks[4], (attention_dim, 1), jnp.float32) * s
    # stacked LSTM
    p['lstm'] = []
    in_dim = embedding_dim + encoder_hidden_dim
    for l in range(num_layers):
        kk = jax.random.split(ks[5 + l], 4)
        p['lstm'].append({
            'Wih': jax.random.normal(kk[0], (in_dim, 4 * hidden_dim), jnp.float32) * s,
            'Whh': jax.random.normal(kk[1], (hidden_dim, 4 * hidden_dim), jnp.float32) * s,
            # b_ih + b_hh folded together (PyTorch has both)
            'b': (jax.random.normal(kk[2], (1, 4 * hidden_dim), jnp.float32) * s
                  + jax.random.normal(kk[3], (1, 4 * hidden_dim), jnp.float32) * s),
        })
        in_dim = hidden_dim
    out_in = hidden_dim + encoder_hidden_dim + embedding_dim
    p['Wout'] = jax.random.normal(ks[5 + num_layers], (out_in, vocab_size), jnp.float32) * s
    p['bout'] = jax.random.normal(ks[6 + num_layers], (1, vocab_size), jnp.float32) * s
    return p


# ------------------------------ reference (plain JAX, f32) -------------------

def decoder_forward_ref(params, tokens, hidden, encoder_outputs, encoder_mask):
    h0, c0 = hidden
    embedded = params['emb'][tokens[:, 0]]
    h_top = h0[-1]
    hproj = h_top @ params['Wa_h']
    eproj = jnp.einsum('bse,ea->bsa', encoder_outputs, params['Wa_e'])
    energy = jnp.tanh(eproj + hproj[:, None, :] + params['ba'][None])
    scores = jnp.einsum('bsa,a->bs', energy, params['v'][:, 0])
    scores = jnp.where(encoder_mask > 0, scores, -1e10)
    attn = jax.nn.softmax(scores, axis=1)
    context = jnp.einsum('bs,bse->be', attn, encoder_outputs)
    x = jnp.concatenate([embedded, context], axis=1)
    H = h0.shape[-1]
    new_h, new_c = [], []
    for l, layer in enumerate(params['lstm']):
        gates = x @ layer['Wih'] + h0[l] @ layer['Whh'] + layer['b']
        i = jax.nn.sigmoid(gates[:, :H])
        f = jax.nn.sigmoid(gates[:, H:2 * H])
        g = jnp.tanh(gates[:, 2 * H:3 * H])
        o = jax.nn.sigmoid(gates[:, 3 * H:])
        c = f * c0[l] + i * g
        h = o * jnp.tanh(c)
        new_h.append(h)
        new_c.append(c)
        x = h
    out_cat = jnp.concatenate([x, context, embedded], axis=1)
    pred = out_cat @ params['Wout'] + params['bout']
    return pred, (jnp.stack(new_h), jnp.stack(new_c)), attn


# ------------------------------ main -----------------------------------------

if __name__ == "__main__":
    vocab_size, embedding_dim, hidden_dim = 64, 32, 32
    num_layers, attention_dim = 2, 16
    encoder_hidden_dim = 2 * hidden_dim
    B, S = 2, 8

    key = jax.random.PRNGKey(0)
    kp, kt, kh, kc, ke = jax.random.split(key, 5)
    params = init_decoder_params(kp, vocab_size, embedding_dim, hidden_dim,
                                 num_layers, attention_dim, encoder_hidden_dim)

    tokens = jax.random.randint(kt, (B, 1), 0, vocab_size, dtype=jnp.int32)
    h0 = jax.random.normal(kh, (num_layers, B, hidden_dim), jnp.float32) * 0.1
    c0 = jax.random.normal(kc, (num_layers, B, hidden_dim), jnp.float32) * 0.1
    enc = jax.random.normal(ke, (B, S, encoder_hidden_dim), jnp.float32) * 0.1
    lens = jnp.array([S, 5])
    mask = (jnp.arange(S)[None, :] < lens[:, None]).astype(jnp.float32)

    # Step-invariant prep (done once per model / per source sequence).
    prepared = prepare_decoder_weights(params)
    enc_cache = precompute_encoder(prepared, enc, mask)

    pred, (hn, cn), attn = decoder_forward(params, tokens, (h0, c0), enc, mask,
                                           prepared=prepared, enc_cache=enc_cache)
    jax.block_until_ready((pred, hn, cn, attn))

    # Correctness check vs. plain-f32 JAX reference.  Tolerances account for
    # bf16 MXU operands + approx reciprocal in the kernel (f32 accumulation).
    pred_r, (hn_r, cn_r), attn_r = decoder_forward_ref(params, tokens, (h0, c0), enc, mask)
    assert pred.shape == (B, vocab_size)
    assert attn.shape == (B, S)
    assert hn.shape == (num_layers, B, hidden_dim)
    assert cn.shape == (num_layers, B, hidden_dim)
    assert jnp.allclose(pred, pred_r, atol=2e-2), "prediction mismatch"
    assert jnp.allclose(hn, hn_r, atol=1e-2), "hidden state mismatch"
    assert jnp.allclose(cn, cn_r, atol=1e-2), "cell state mismatch"
    assert jnp.allclose(attn, attn_r, atol=1e-2), "attention weights mismatch"
    assert bool(jnp.all(jnp.isfinite(pred))), "non-finite prediction"

    print("KERNEL_OK")
</pallas_src>

<mosaic_0001>
module attributes {stable_mosaic.version = 11 : i64} {
  func.func @kernel(%arg0: memref<2x32xf32, #tpu.memory_space<vmem>>, %arg1: memref<2x2x32xf32, #tpu.memory_space<vmem>>, %arg2: memref<2x2x32xf32, #tpu.memory_space<vmem>>, %arg3: memref<2x8x64xbf16, #tpu.memory_space<vmem>>, %arg4: memref<2x8x16xf32, #tpu.memory_space<vmem>>, %arg5: memref<2x8xf32, #tpu.memory_space<vmem>>, %arg6: memref<32x16xbf16, #tpu.memory_space<vmem>>, %arg7: memref<1x1x16xf32, #tpu.memory_space<vmem>>, %arg8: memref<32x128xbf16, #tpu.memory_space<vmem>>, %arg9: memref<64x128xbf16, #tpu.memory_space<vmem>>, %arg10: memref<32x128xbf16, #tpu.memory_space<vmem>>, %arg11: memref<1x128xf32, #tpu.memory_space<vmem>>, %arg12: memref<32x128xbf16, #tpu.memory_space<vmem>>, %arg13: memref<32x128xbf16, #tpu.memory_space<vmem>>, %arg14: memref<1x128xf32, #tpu.memory_space<vmem>>, %arg15: memref<2x2x32xf32, #tpu.memory_space<vmem>>, %arg16: memref<2x2x32xf32, #tpu.memory_space<vmem>>, %arg17: memref<2x8xf32, #tpu.memory_space<vmem>>, %arg18: memref<2x64xf32, #tpu.memory_space<vmem>>) attributes {dimension_semantics = [], scalar_prefetch = 0 : i64, scratch_operands = 0 : i64, tpu.core_type = #tpu.core_type<tc>} {
    %c0 = arith.constant 0 : index
    %c0_0 = arith.constant 0 : index
    %0 = vector.load %arg0[%c0, %c0_0] : memref<2x32xf32, #tpu.memory_space<vmem>>, vector<2x32xf32>
    %c1 = arith.constant 1 : index
    %c0_1 = arith.constant 0 : index
    %c0_2 = arith.constant 0 : index
    %1 = vector.load %arg1[%c1, %c0_1, %c0_2] : memref<2x2x32xf32, #tpu.memory_space<vmem>>, vector<1x2x32xf32>
    %2 = vector.shape_cast %1 : vector<1x2x32xf32> to vector<2x32xf32>
    %3 = arith.truncf %2 : vector<2x32xf32> to vector<2x32xbf16>
    %c0_3 = arith.constant 0 : index
    %c0_4 = arith.constant 0 : index
    %4 = vector.load %arg6[%c0_3, %c0_4] : memref<32x16xbf16, #tpu.memory_space<vmem>>, vector<32x16xbf16>
    %cst = arith.constant dense<0.000000e+00> : vector<2x16xf32>
    %5 = tpu.matmul %3, %4, %cst {dimension_numbers = #tpu.dot_dimension_numbers<[1], [0], [0], [1], [0, 0, 1, 1], [], []>} : vector<2x32xbf16>, vector<32x16xbf16>, vector<2x16xf32> -> vector<2x16xf32>
    %6 = vector.shape_cast %5 : vector<2x16xf32> to vector<2x1x16xf32>
    %7 = vector.broadcast %6 : vector<2x1x16xf32> to vector<2x8x16xf32>
    %c0_5 = arith.constant 0 : index
    %c0_6 = arith.constant 0 : index
    %c0_7 = arith.constant 0 : index
    %8 = vector.load %arg4[%c0_5, %c0_6, %c0_7] : memref<2x8x16xf32, #tpu.memory_space<vmem>>, vector<2x8x16xf32>
    %9 = arith.addf %8, %7 : vector<2x8x16xf32>
    %10 = math.tanh %9 : vector<2x8x16xf32>
    %c0_8 = arith.constant 0 : index
    %c0_9 = arith.constant 0 : index
    %c0_10 = arith.constant 0 : index
    %11 = vector.load %arg7[%c0_8, %c0_9, %c0_10] : memref<1x1x16xf32, #tpu.memory_space<vmem>>, vector<1x1x16xf32>
    %12 = vector.broadcast %11 : vector<1x1x16xf32> to vector<2x8x16xf32>
    %13 = arith.mulf %10, %12 : vector<2x8x16xf32>
    %cst_11 = arith.constant dense<0.000000e+00> : vector<2x8xf32>
    %14 = vector.multi_reduction <add>, %13, %cst_11 [2] : vector<2x8x16xf32> to vector<2x8xf32>
    %c0_12 = arith.constant 0 : index
    %c0_13 = arith.constant 0 : index
    %15 = vector.load %arg5[%c0_12, %c0_13] : memref<2x8xf32, #tpu.memory_space<vmem>>, vector<2x8xf32>
    %16 = arith.addf %14, %15 : vector<2x8xf32>
    %cst_14 = arith.constant dense<0xFF800000> : vector<2xf32>
    %17 = vector.multi_reduction <maximumf>, %16, %cst_14 [1] : vector<2x8xf32> to vector<2xf32>
    %18 = vector.shape_cast %17 : vector<2xf32> to vector<2x1xf32>
    %19 = vector.broadcast %18 : vector<2x1xf32> to vector<2x8xf32>
    %20 = arith.subf %16, %19 : vector<2x8xf32>
    %21 = math.exp %20 : vector<2x8xf32>
    %cst_15 = arith.constant dense<0.000000e+00> : vector<2xf32>
    %22 = vector.multi_reduction <add>, %21, %cst_15 [1] : vector<2x8xf32> to vector<2xf32>
    %23 = vector.shape_cast %22 : vector<2xf32> to vector<2x1xf32>
    %24 = tpu.reciprocal %23 {approx = true} : vector<2x1xf32> -> vector<2x1xf32>
    %25 = vector.broadcast %24 : vector<2x1xf32> to vector<2x8xf32>
    %26 = arith.mulf %21, %25 : vector<2x8xf32>
    %c0_16 = arith.constant 0 : index
    %c0_17 = arith.constant 0 : index
    %27 = vector.load %arg17[%c0_16, %c0_17] : memref<2x8xf32, #tpu.memory_space<vmem>>, vector<2x8xf32>
    tpu.vector_store %arg17[%c0_16, %c0_17], %26 {strides = array<i32>} : memref<2x8xf32, #tpu.memory_space<vmem>>, vector<2x8xf32>,
    %28 = vector.extract_strided_slice %26 {offsets = [0, 0], sizes = [1, 8], strides = [1, 1]} : vector<2x8xf32> to vector<1x8xf32>
    %29 = arith.truncf %28 : vector<1x8xf32> to vector<1x8xbf16>
    %c0_18 = arith.constant 0 : index
    %c0_19 = arith.constant 0 : index
    %c0_20 = arith.constant 0 : index
    %30 = vector.load %arg3[%c0_18, %c0_19, %c0_20] : memref<2x8x64xbf16, #tpu.memory_space<vmem>>, vector<1x8x64xbf16>
    %31 = vector.shape_cast %30 : vector<1x8x64xbf16> to vector<8x64xbf16>
    %cst_21 = arith.constant dense<0.000000e+00> : vector<1x64xf32>
    %32 = tpu.matmul %29, %31, %cst_21 {dimension_numbers = #tpu.dot_dimension_numbers<[1], [0], [0], [1], [0, 0, 1, 1], [], []>} : vector<1x8xbf16>, vector<8x64xbf16>, vector<1x64xf32> -> vector<1x64xf32>
    %33 = vector.extract_strided_slice %26 {offsets = [1, 0], sizes = [1, 8], strides = [1, 1]} : vector<2x8xf32> to vector<1x8xf32>
    %34 = arith.truncf %33 : vector<1x8xf32> to vector<1x8xbf16>
    %c1_22 = arith.constant 1 : index
    %c0_23 = arith.constant 0 : index
    %c0_24 = arith.constant 0 : index
    %35 = vector.load %arg3[%c1_22, %c0_23, %c0_24] : memref<2x8x64xbf16, #tpu.memory_space<vmem>>, vector<1x8x64xbf16>
    %36 = vector.shape_cast %35 : vector<1x8x64xbf16> to vector<8x64xbf16>
    %cst_25 = arith.constant dense<0.000000e+00> : vector<1x64xf32>
    %37 = tpu.matmul %34, %36, %cst_25 {dimension_numbers = #tpu.dot_dimension_numbers<[1], [0], [0], [1], [0, 0, 1, 1], [], []>} : vector<1x8xbf16>, vector<8x64xbf16>, vector<1x64xf32> -> vector<1x64xf32>
    %38 = tpu.concatenate %32, %37 in 0 : vector<1x64xf32>, vector<1x64xf32> -> vector<2x64xf32>
    %c0_26 = arith.constant 0 : index
    %c0_27 = arith.constant 0 : index
    %39 = vector.load %arg18[%c0_26, %c0_27] : memref<2x64xf32, #tpu.memory_space<vmem>>, vector<2x64xf32>
    tpu.vector_store %arg18[%c0_26, %c0_27], %38 {strides = array<i32>} : memref<2x64xf32, #tpu.memory_space<vmem>>, vector<2x64xf32>,
    %40 = arith.truncf %38 : vector<2x64xf32> to vector<2x64xbf16>
    %c0_28 = arith.constant 0 : index
    %c0_29 = arith.constant 0 : index
    %c0_30 = arith.constant 0 : index
    %41 = vector.load %arg1[%c0_28, %c0_29, %c0_30] : memref<2x2x32xf32, #tpu.memory_space<vmem>>, vector<1x2x32xf32>
    %42 = vector.shape_cast %41 : vector<1x2x32xf32> to vector<2x32xf32>
    %c0_31 = arith.constant 0 : index
    %c0_32 = arith.constant 0 : index
    %c0_33 = arith.constant 0 : index
    %43 = vector.load %arg2[%c0_31, %c0_32, %c0_33] : memref<2x2x32xf32, #tpu.memory_space<vmem>>, vector<1x2x32xf32>
    %44 = vector.shape_cast %43 : vector<1x2x32xf32> to vector<2x32xf32>
    %45 = arith.truncf %0 : vector<2x32xf32> to vector<2x32xbf16>
    %c0_34 = arith.constant 0 : index
    %c0_35 = arith.constant 0 : index
    %46 = vector.load %arg8[%c0_34, %c0_35] : memref<32x128xbf16, #tpu.memory_space<vmem>>, vector<32x128xbf16>
    %cst_36 = arith.constant dense<0.000000e+00> : vector<2x128xf32>
    %47 = tpu.matmul %45, %46, %cst_36 {dimension_numbers = #tpu.dot_dimension_numbers<[1], [0], [0], [1], [0, 0, 1, 1], [], []>} : vector<2x32xbf16>, vector<32x128xbf16>, vector<2x128xf32> -> vector<2x128xf32>
    %c0_37 = arith.constant 0 : index
    %c0_38 = arith.constant 0 : index
    %48 = vector.load %arg9[%c0_37, %c0_38] : memref<64x128xbf16, #tpu.memory_space<vmem>>, vector<64x128xbf16>
    %cst_39 = arith.constant dense<0.000000e+00> : vector<2x128xf32>
    %49 = tpu.matmul %40, %48, %cst_39 {dimension_numbers = #tpu.dot_dimension_numbers<[1], [0], [0], [1], [0, 0, 1, 1], [], []>} : vector<2x64xbf16>, vector<64x128xbf16>, vector<2x128xf32> -> vector<2x128xf32>
    %50 = arith.addf %47, %49 : vector<2x128xf32>
    %51 = arith.truncf %42 : vector<2x32xf32> to vector<2x32xbf16>
    %c0_40 = arith.constant 0 : index
    %c0_41 = arith.constant 0 : index
    %52 = vector.load %arg10[%c0_40, %c0_41] : memref<32x128xbf16, #tpu.memory_space<vmem>>, vector<32x128xbf16>
    %cst_42 = arith.constant dense<0.000000e+00> : vector<2x128xf32>
    %53 = tpu.matmul %51, %52, %cst_42 {dimension_numbers = #tpu.dot_dimension_numbers<[1], [0], [0], [1], [0, 0, 1, 1], [], []>} : vector<2x32xbf16>, vector<32x128xbf16>, vector<2x128xf32> -> vector<2x128xf32>
    %54 = arith.addf %50, %53 : vector<2x128xf32>
    %c0_43 = arith.constant 0 : index
    %c0_44 = arith.constant 0 : index
    %55 = vector.load %arg11[%c0_43, %c0_44] : memref<1x128xf32, #tpu.memory_space<vmem>>, vector<1x128xf32>
    %56 = vector.broadcast %55 : vector<1x128xf32> to vector<2x128xf32>
    %57 = arith.addf %54, %56 : vector<2x128xf32>
    %58 = vector.extract_strided_slice %57 {offsets = [0, 0], sizes = [2, 32], strides = [1, 1]} : vector<2x128xf32> to vector<2x32xf32>
    %59 = arith.negf %58 : vector<2x32xf32>
    %60 = math.exp %59 : vector<2x32xf32>
    %cst_45 = arith.constant 1.000000e+00 : f32
    %61 = vector.broadcast %cst_45 : f32 to vector<2x32xf32>
    %62 = arith.addf %61, %60 : vector<2x32xf32>
    %63 = arith.divf %61, %62 : vector<2x32xf32>
    %64 = vector.extract_strided_slice %57 {offsets = [0, 32], sizes = [2, 32], strides = [1, 1]} : vector<2x128xf32> to vector<2x32xf32>
    %65 = arith.negf %64 : vector<2x32xf32>
    %66 = math.exp %65 : vector<2x32xf32>
    %cst_46 = arith.constant 1.000000e+00 : f32
    %67 = vector.broadcast %cst_46 : f32 to vector<2x32xf32>
    %68 = arith.addf %67, %66 : vector<2x32xf32>
    %69 = arith.divf %67, %68 : vector<2x32xf32>
    %70 = vector.extract_strided_slice %57 {offsets = [0, 64], sizes = [2, 32], strides = [1, 1]} : vector<2x128xf32> to vector<2x32xf32>
    %71 = math.tanh %70 : vector<2x32xf32>
    %72 = vector.extract_strided_slice %57 {offsets = [0, 96], sizes = [2, 32], strides = [1, 1]} : vector<2x128xf32> to vector<2x32xf32>
    %73 = arith.negf %72 : vector<2x32xf32>
    %74 = math.exp %73 : vector<2x32xf32>
    %cst_47 = arith.constant 1.000000e+00 : f32
    %75 = vector.broadcast %cst_47 : f32 to vector<2x32xf32>
    %76 = arith.addf %75, %74 : vector<2x32xf32>
    %77 = arith.divf %75, %76 : vector<2x32xf32>
    %78 = arith.mulf %69, %44 : vector<2x32xf32>
    %79 = arith.mulf %63, %71 : vector<2x32xf32>
    %80 = arith.addf %78, %79 : vector<2x32xf32>
    %81 = math.tanh %80 : vector<2x32xf32>
    %82 = arith.mulf %77, %81 : vector<2x32xf32>
    %c0_48 = arith.constant 0 : index
    %c0_49 = arith.constant 0 : index
    %c0_50 = arith.constant 0 : index
    %83 = vector.load %arg15[%c0_48, %c0_49, %c0_50] : memref<2x2x32xf32, #tpu.memory_space<vmem>>, vector<1x2x32xf32>
    %84 = vector.shape_cast %83 : vector<1x2x32xf32> to vector<2x32xf32>
    %85 = vector.shape_cast %82 : vector<2x32xf32> to vector<1x2x32xf32>
    tpu.vector_store %arg15[%c0_48, %c0_49, %c0_50], %85 {strides = array<i32>} : memref<2x2x32xf32, #tpu.memory_space<vmem>>, vector<1x2x32xf32>,
    %c0_51 = arith.constant 0 : index
    %c0_52 = arith.constant 0 : index
    %c0_53 = arith.constant 0 : index
    %86 = vector.load %arg16[%c0_51, %c0_52, %c0_53] : memref<2x2x32xf32, #tpu.memory_space<vmem>>, vector<1x2x32xf32>
    %87 = vector.shape_cast %86 : vector<1x2x32xf32> to vector<2x32xf32>
    %88 = vector.shape_cast %80 : vector<2x32xf32> to vector<1x2x32xf32>
    tpu.vector_store %arg16[%c0_51, %c0_52, %c0_53], %88 {strides = array<i32>} : memref<2x2x32xf32, #tpu.memory_space<vmem>>, vector<1x2x32xf32>,
    %c1_54 = arith.constant 1 : index
    %c0_55 = arith.constant 0 : index
    %c0_56 = arith.constant 0 : index
    %89 = vector.load %arg1[%c1_54, %c0_55, %c0_56] : memref<2x2x32xf32, #tpu.memory_space<vmem>>, vector<1x2x32xf32>
    %90 = vector.shape_cast %89 : vector<1x2x32xf32> to vector<2x32xf32>
    %c1_57 = arith.constant 1 : index
    %c0_58 = arith.constant 0 : index
    %c0_59 = arith.constant 0 : index
    %91 = vector.load %arg2[%c1_57, %c0_58, %c0_59] : memref<2x2x32xf32, #tpu.memory_space<vmem>>, vector<1x2x32xf32>
    %92 = vector.shape_cast %91 : vector<1x2x32xf32> to vector<2x32xf32>
    %93 = arith.truncf %82 : vector<2x32xf32> to vector<2x32xbf16>
    %c0_60 = arith.constant 0 : index
    %c0_61 = arith.constant 0 : index
    %94 = vector.load %arg12[%c0_60, %c0_61] : memref<32x128xbf16, #tpu.memory_space<vmem>>, vector<32x128xbf16>
    %cst_62 = arith.constant dense<0.000000e+00> : vector<2x128xf32>
    %95 = tpu.matmul %93, %94, %cst_62 {dimension_numbers = #tpu.dot_dimension_numbers<[1], [0], [0], [1], [0, 0, 1, 1], [], []>} : vector<2x32xbf16>, vector<32x128xbf16>, vector<2x128xf32> -> vector<2x128xf32>
    %96 = arith.truncf %90 : vector<2x32xf32> to vector<2x32xbf16>
    %c0_63 = arith.constant 0 : index
    %c0_64 = arith.constant 0 : index
    %97 = vector.load %arg13[%c0_63, %c0_64] : memref<32x128xbf16, #tpu.memory_space<vmem>>, vector<32x128xbf16>
    %cst_65 = arith.constant dense<0.000000e+00> : vector<2x128xf32>
    %98 = tpu.matmul %96, %97, %cst_65 {dimension_numbers = #tpu.dot_dimension_numbers<[1], [0], [0], [1], [0, 0, 1, 1], [], []>} : vector<2x32xbf16>, vector<32x128xbf16>, vector<2x128xf32> -> vector<2x128xf32>
    %99 = arith.addf %95, %98 : vector<2x128xf32>
    %c0_66 = arith.constant 0 : index
    %c0_67 = arith.constant 0 : index
    %100 = vector.load %arg14[%c0_66, %c0_67] : memref<1x128xf32, #tpu.memory_space<vmem>>, vector<1x128xf32>
    %101 = vector.broadcast %100 : vector<1x128xf32> to vector<2x128xf32>
    %102 = arith.addf %99, %101 : vector<2x128xf32>
    %103 = vector.extract_strided_slice %102 {offsets = [0, 0], sizes = [2, 32], strides = [1, 1]} : vector<2x128xf32> to vector<2x32xf32>
    %104 = arith.negf %103 : vector<2x32xf32>
    %105 = math.exp %104 : vector<2x32xf32>
    %cst_68 = arith.constant 1.000000e+00 : f32
    %106 = vector.broadcast %cst_68 : f32 to vector<2x32xf32>
    %107 = arith.addf %106, %105 : vector<2x32xf32>
    %108 = arith.divf %106, %107 : vector<2x32xf32>
    %109 = vector.extract_strided_slice %102 {offsets = [0, 32], sizes = [2, 32], strides = [1, 1]} : vector<2x128xf32> to vector<2x32xf32>
    %110 = arith.negf %109 : vector<2x32xf32>
    %111 = math.exp %110 : vector<2x32xf32>
    %cst_69 = arith.constant 1.000000e+00 : f32
    %112 = vector.broadcast %cst_69 : f32 to vector<2x32xf32>
    %113 = arith.addf %112, %111 : vector<2x32xf32>
    %114 = arith.divf %112, %113 : vector<2x32xf32>
    %115 = vector.extract_strided_slice %102 {offsets = [0, 64], sizes = [2, 32], strides = [1, 1]} : vector<2x128xf32> to vector<2x32xf32>
    %116 = math.tanh %115 : vector<2x32xf32>
    %117 = vector.extract_strided_slice %102 {offsets = [0, 96], sizes = [2, 32], strides = [1, 1]} : vector<2x128xf32> to vector<2x32xf32>
    %118 = arith.negf %117 : vector<2x32xf32>
    %119 = math.exp %118 : vector<2x32xf32>
    %cst_70 = arith.constant 1.000000e+00 : f32
    %120 = vector.broadcast %cst_70 : f32 to vector<2x32xf32>
    %121 = arith.addf %120, %119 : vector<2x32xf32>
    %122 = arith.divf %120, %121 : vector<2x32xf32>
    %123 = arith.mulf %114, %92 : vector<2x32xf32>
    %124 = arith.mulf %108, %116 : vector<2x32xf32>
    %125 = arith.addf %123, %124 : vector<2x32xf32>
    %126 = math.tanh %125 : vector<2x32xf32>
    %127 = arith.mulf %122, %126 : vector<2x32xf32>
    %c1_71 = arith.constant 1 : index
    %c0_72 = arith.constant 0 : index
    %c0_73 = arith.constant 0 : index
    %128 = vector.load %arg15[%c1_71, %c0_72, %c0_73] : memref<2x2x32xf32, #tpu.memory_space<vmem>>, vector<1x2x32xf32>
    %129 = vector.shape_cast %128 : vector<1x2x32xf32> to vector<2x32xf32>
    %130 = vector.shape_cast %127 : vector<2x32xf32> to vector<1x2x32xf32>
    tpu.vector_store %arg15[%c1_71, %c0_72, %c0_73], %130 {strides = array<i32>} : memref<2x2x32xf32, #tpu.memory_space<vmem>>, vector<1x2x32xf32>,
    %c1_74 = arith.constant 1 : index
    %c0_75 = arith.constant 0 : index
    %c0_76 = arith.constant 0 : index
    %131 = vector.load %arg16[%c1_74, %c0_75, %c0_76] : memref<2x2x32xf32, #tpu.memory_space<vmem>>, vector<1x2x32xf32>
    %132 = vector.shape_cast %131 : vector<1x2x32xf32> to vector<2x32xf32>
    %133 = vector.shape_cast %125 : vector<2x32xf32> to vector<1x2x32xf32>
    tpu.vector_store %arg16[%c1_74, %c0_75, %c0_76], %133 {strides = array<i32>} : memref<2x2x32xf32, #tpu.memory_space<vmem>>, vector<1x2x32xf32>,
    return
  }
}

</mosaic_0001>

<llo_original>
// kernel: tpu_custom_call.1
$region0: #{tpu_custom_call.1}
  #allocation0 [shape = 'u32[]', space=smem, size = 0x4, offset = 0x4, fixed_abs, tag = 'smem constant byte address 0x4 - core index']
  #allocation1 [shape = 'u32[144,128]{1,0:T(1,128)}', space=vmem, size = 0x12000, scoped, tag = 'internal scratch']
  %s0 = inlined_call_operand.hbm [shape: f32[2,32], index: 0, kind: input, shape index: {}]
  %s1 = inlined_call_operand.hbm [shape: f32[2,2,32], index: 1, kind: input, shape index: {}]
  %s2 = inlined_call_operand.hbm [shape: f32[2,2,32], index: 2, kind: input, shape index: {}]
  %s3 = inlined_call_operand.hbm [shape: bf16[2,8,64], index: 3, kind: input, shape index: {}]
  %s4 = inlined_call_operand.vmem [shape: f32[2,8,16], index: 4, kind: input, shape index: {}]
  %s5 = inlined_call_operand.hbm [shape: f32[2,8], index: 5, kind: input, shape index: {}]
  %s6 = inlined_call_operand.vmem [shape: bf16[32,16], index: 6, kind: input, shape index: {}]
  %s7 = inlined_call_operand.vmem [shape: f32[1,1,16], index: 7, kind: input, shape index: {}]
  %s8 = inlined_call_operand.hbm [shape: bf16[32,128], index: 8, kind: input, shape index: {}]
  %s9 = inlined_call_operand.vmem [shape: bf16[64,128], index: 9, kind: input, shape index: {}]
  %s10 = inlined_call_operand.hbm [shape: bf16[32,128], index: 10, kind: input, shape index: {}]
  %s11 = inlined_call_operand.hbm [shape: f32[1,128], index: 11, kind: input, shape index: {}]
  %s12 = inlined_call_operand.vmem [shape: bf16[32,128], index: 12, kind: input, shape index: {}]
  %s13 = inlined_call_operand.hbm [shape: bf16[32,128], index: 13, kind: input, shape index: {}]
  %s14 = inlined_call_operand.vmem [shape: f32[1,128], index: 14, kind: input, shape index: {}]
  %s15 = inlined_call_operand.hbm [shape: f32[2,2,32], index: 15, kind: output, shape index: {0}]
  %s16 = inlined_call_operand.hbm [shape: f32[2,2,32], index: 16, kind: output, shape index: {1}]
  %s17 = inlined_call_operand.hbm [shape: f32[2,8], index: 17, kind: output, shape index: {2}]
  %s18 = inlined_call_operand.hbm [shape: f32[2,64], index: 18, kind: output, shape index: {3}]
  %19 = xla_tuple %s15, %s16, %s17, %s18
  %s20 = sld [smem:[#allocation0]]
  $region130: #{tpu_custom_call.1} parent=0
    _
  %s22 = ssub.s32 1, %s20
  %s23 = scalar_select 0, %s22, %s20
  $region1: #{tpu_custom_call.1} parent=0
    #allocation2 [shape = 'u8[1024]{0}', space=vmem, size = 0x400, scoped, tag = 'input window, operand 0, single buffered']
    #allocation3 [shape = 's32[1]{0}', space=sflag, size = 0x4, scoped, tag = 'scoped memory for tpu_custom_call.1']
    #allocation4 [shape = 's32[1]{0}', space=sflag, size = 0x4, scoped, tag = 'scoped memory for tpu_custom_call.1']
    #allocation5 [shape = 'u8[2048]{0}', space=vmem, size = 0x800, scoped, tag = 'input window, operand 1, single buffered']
    #allocation6 [shape = 's32[1]{0}', space=sflag, size = 0x4, scoped, tag = 'scoped memory for tpu_custom_call.1']
    #allocation7 [shape = 'u8[2048]{0}', space=vmem, size = 0x800, scoped, tag = 'input window, operand 2, single buffered']
    #allocation8 [shape = 'u8[4096]{0}', space=vmem, size = 0x1000, scoped, tag = 'input window, operand 3, single buffered']
    #allocation9 [shape = 's32[1]{0}', space=sflag, size = 0x4, scoped, tag = 'scoped memory for tpu_custom_call.1']
    #allocation10 [shape = 'u8[1024]{0}', space=vmem, size = 0x400, scoped, tag = 'input window, operand 5, single buffered']
    #allocation11 [shape = 'u8[8192]{0}', space=vmem, size = 0x2000, scoped, tag = 'input window, operand 8, single buffered']
    #allocation12 [shape = 's32[1]{0}', space=sflag, size = 0x4, scoped, tag = 'scoped memory for tpu_custom_call.1']
    #allocation13 [shape = 'u8[8192]{0}', space=vmem, size = 0x2000, scoped, tag = 'input window, operand 10, single buffered']
    #allocation14 [shape = 'u8[512]{0}', space=vmem, size = 0x400, scoped, tag = 'input window, operand 11, single buffered']
    #allocation15 [shape = 's32[1]{0}', space=sflag, size = 0x4, scoped, tag = 'scoped memory for tpu_custom_call.1']
    #allocation16 [shape = 'u8[8192]{0}', space=vmem, size = 0x2000, scoped, tag = 'input window, operand 13, single buffered']
    #allocation17 [shape = 'u8[2048]{0}', space=vmem, size = 0x800, scoped, tag = 'output window, operand 0, single buffered']
    #allocation18 [shape = 'u8[2048]{0}', space=vmem, size = 0x800, scoped, tag = 'output window, operand 1, single buffered']
    #allocation19 [shape = 's32[1]{0}', space=sflag, size = 0x4, scoped, tag = 'scoped memory for tpu_custom_call.1']
    #allocation20 [shape = 'u8[1024]{0}', space=vmem, size = 0x400, scoped, tag = 'output window, operand 2, single buffered']
    #allocation21 [shape = 'u8[1024]{0}', space=vmem, size = 0x400, scoped, tag = 'output window, operand 3, single buffered']
    #allocation22 [shape = 's32[1]{0}', space=sflag, size = 0x4, scoped, tag = 'scoped memory for tpu_custom_call.1']
    %24 = vsyncpa [#allocation3], 0
    %25 = vsyncpa [#allocation6], 0
    %26 = vsyncpa [#allocation9], 0
    %27 = vsyncpa [#allocation12], 0
    %28 = vsyncpa [#allocation15], 0
    %29 = vsyncpa [#allocation4], 0
    %30 = vsyncpa [#allocation19], 0
    %31 = vsyncpa [#allocation22], 0
    // Predicated region
    $region2: #{tpu_custom_call.1} parent=1 // pred_check
      _
    $region3: #{tpu_custom_call.1} parent=1 // pred_check_branch
      %33 = sbr.rel (0) target = $region5
    $region4: #{tpu_custom_call.1} parent=1 // pred_region
      %s35 = ssub.s32 32, 32
      %36 = vsyncadd [#allocation3], %s35
      %s38 = sshll.u32 [#allocation2], 4
      %s39 = int_to_ptr.vmem [resolvable:$true] %s38
      %41 = dma.hbm_to_vmem [thread:$0]  %s0, 32, %s39, [#allocation3]
    $region5: #{tpu_custom_call.1} parent=1 // pred_fallthru
      _
    // Predicated region
    $region6: #{tpu_custom_call.1} parent=1 // pred_check
      _
    $region7: #{tpu_custom_call.1} parent=1 // pred_check_branch
      %43 = sbr.rel (0) target = $region9
    $region8: #{tpu_custom_call.1} parent=1 // pred_region
      %s45 = ssub.s32 64, 64
      %46 = vsyncadd [#allocation6], %s45
      %s47 = sshll.u32 [#allocation5], 4
      %s48 = int_to_ptr.vmem [resolvable:$true] %s47
      %53 = dma.hbm_to_vmem [thread:$0]  %s1, 64, %s48, [#allocation6], 32, 32, 2
    $region9: #{tpu_custom_call.1} parent=1 // pred_fallthru
      _
    // Predicated region
    $region10: #{tpu_custom_call.1} parent=1 // pred_check
      _
    $region11: #{tpu_custom_call.1} parent=1 // pred_check_branch
      %55 = sbr.rel (0) target = $region13
    $region12: #{tpu_custom_call.1} parent=1 // pred_region
      %s57 = ssub.s32 64, 64
      %58 = vsyncadd [#allocation6], %s57
      %s59 = sshll.u32 [#allocation7], 4
      %s60 = int_to_ptr.vmem [resolvable:$true] %s59
      %65 = dma.hbm_to_vmem [thread:$0]  %s2, 64, %s60, [#allocation6], 32, 32, 2
    $region13: #{tpu_custom_call.1} parent=1 // pred_fallthru
      _
    // Predicated region
    $region14: #{tpu_custom_call.1} parent=1 // pred_check
      _
    $region15: #{tpu_custom_call.1} parent=1 // pred_check_branch
      %67 = sbr.rel (0) target = $region17
    $region16: #{tpu_custom_call.1} parent=1 // pred_region
      %s69 = ssub.s32 128, 128
      %70 = vsyncadd [#allocation9], %s69
      %s71 = sshll.u32 [#allocation8], 4
      %s72 = int_to_ptr.vmem [resolvable:$true] %s71
      %77 = dma.hbm_to_vmem [thread:$0]  %s3, 128, %s72, [#allocation9], 64, 64, 4
    $region17: #{tpu_custom_call.1} parent=1 // pred_fallthru
      _
    // Predicated region
    $region18: #{tpu_custom_call.1} parent=1 // pred_check
      _
    $region19: #{tpu_custom_call.1} parent=1 // pred_check_branch
      %79 = sbr.rel (0) target = $region21
    $region20: #{tpu_custom_call.1} parent=1 // pred_region
      _
    $region21: #{tpu_custom_call.1} parent=1 // pred_fallthru
      _
    // Predicated region
    $region22: #{tpu_custom_call.1} parent=1 // pred_check
      _
    $region23: #{tpu_custom_call.1} parent=1 // pred_check_branch
      %81 = sbr.rel (0) target = $region25
    $region24: #{tpu_custom_call.1} parent=1 // pred_region
      %s83 = ssub.s32 32, 32
      %84 = vsyncadd [#allocation9], %s83
      %s86 = sshll.u32 [#allocation10], 4
      %s87 = int_to_ptr.vmem [resolvable:$true] %s86
      %89 = dma.hbm_to_vmem [thread:$0]  %s5, 32, %s87, [#allocation9]
    $region25: #{tpu_custom_call.1} parent=1 // pred_fallthru
      _
    // Predicated region
    $region26: #{tpu_custom_call.1} parent=1 // pred_check
      _
    $region27: #{tpu_custom_call.1} parent=1 // pred_check_branch
      %91 = sbr.rel (0) target = $region29
    $region28: #{tpu_custom_call.1} parent=1 // pred_region
      _
    $region29: #{tpu_custom_call.1} parent=1 // pred_fallthru
      _
    // Predicated region
    $region30: #{tpu_custom_call.1} parent=1 // pred_check
      _
    $region31: #{tpu_custom_call.1} parent=1 // pred_check_branch
      %93 = sbr.rel (0) target = $region33
    $region32: #{tpu_custom_call.1} parent=1 // pred_region
      _
    $region33: #{tpu_custom_call.1} parent=1 // pred_fallthru
      _
    // Predicated region
    $region34: #{tpu_custom_call.1} parent=1 // pred_check
      _
    $region35: #{tpu_custom_call.1} parent=1 // pred_check_branch
      %95 = sbr.rel (0) target = $region37
    $region36: #{tpu_custom_call.1} parent=1 // pred_region
      %s97 = ssub.s32 256, 256
      %98 = vsyncadd [#allocation12], %s97
      %s99 = sshll.u32 [#allocation11], 4
      %s100 = int_to_ptr.vmem [resolvable:$true] %s99
      %105 = dma.hbm_to_vmem [thread:$0]  %s8, 256, %s100, [#allocation12], 64, 64, 4
    $region37: #{tpu_custom_call.1} parent=1 // pred_fallthru
      _
    // Predicated region
    $region38: #{tpu_custom_call.1} parent=1 // pred_check
      _
    $region39: #{tpu_custom_call.1} parent=1 // pred_check_branch
      %107 = sbr.rel (0) target = $region41
    $region40: #{tpu_custom_call.1} parent=1 // pred_region
      _
    $region41: #{tpu_custom_call.1} parent=1 // pred_fallthru
      _
    // Predicated region
    $region42: #{tpu_custom_call.1} parent=1 // pred_check
      _
    $region43: #{tpu_custom_call.1} parent=1 // pred_check_branch
      %109 = sbr.rel (0) target = $region45
    $region44: #{tpu_custom_call.1} parent=1 // pred_region
      %s111 = ssub.s32 256, 256
      %112 = vsyncadd [#allocation12], %s111
      %s113 = sshll.u32 [#allocation13], 4
      %s114 = int_to_ptr.vmem [resolvable:$true] %s113
      %119 = dma.hbm_to_vmem [thread:$0]  %s10, 256, %s114, [#allocation12], 64, 64, 4
    $region45: #{tpu_custom_call.1} parent=1 // pred_fallthru
      _
    // Predicated region
    $region46: #{tpu_custom_call.1} parent=1 // pred_check
      _
    $region47: #{tpu_custom_call.1} parent=1 // pred_check_branch
      %121 = sbr.rel (0) target = $region49
    $region48: #{tpu_custom_call.1} parent=1 // pred_region
      %s123 = ssub.s32 16, 16
      %124 = vsyncadd [#allocation15], %s123
      %s126 = sshll.u32 [#allocation14], 4
      %s127 = int_to_ptr.vmem [resolvable:$true] %s126
      %129 = dma.hbm_to_vmem [thread:$0]  %s11, 16, %s127, [#allocation15]
    $region49: #{tpu_custom_call.1} parent=1 // pred_fallthru
      _
    // Predicated region
    $region50: #{tpu_custom_call.1} parent=1 // pred_check
      _
    $region51: #{tpu_custom_call.1} parent=1 // pred_check_branch
      %131 = sbr.rel (0) target = $region53
    $region52: #{tpu_custom_call.1} parent=1 // pred_region
      _
    $region53: #{tpu_custom_call.1} parent=1 // pred_fallthru
      _
    // Predicated region
    $region54: #{tpu_custom_call.1} parent=1 // pred_check
      _
    $region55: #{tpu_custom_call.1} parent=1 // pred_check_branch
      %133 = sbr.rel (0) target = $region57
    $region56: #{tpu_custom_call.1} parent=1 // pred_region
      %s135 = ssub.s32 256, 256
      %136 = vsyncadd [#allocation15], %s135
      %s137 = sshll.u32 [#allocation16], 4
      %s138 = int_to_ptr.vmem [resolvable:$true] %s137
      %143 = dma.hbm_to_vmem [thread:$0]  %s13, 256, %s138, [#allocation15], 64, 64, 4
    $region57: #{tpu_custom_call.1} parent=1 // pred_fallthru
      _
    // Predicated region
    $region58: #{tpu_custom_call.1} parent=1 // pred_check
      _
    $region59: #{tpu_custom_call.1} parent=1 // pred_check_branch
      %145 = sbr.rel (0) target = $region61
    $region60: #{tpu_custom_call.1} parent=1 // pred_region
      _
    $region61: #{tpu_custom_call.1} parent=1 // pred_fallthru
      _
    // Predicated region
    $region62: #{tpu_custom_call.1} parent=1 // pred_check
      _
    $region63: #{tpu_custom_call.1} parent=1 // pred_check_branch
      %147 = sbr.rel (0) target = $region65
    $region64: #{tpu_custom_call.1} parent=1 // pred_region
      %148 = dma.done [#allocation3], 32
    $region65: #{tpu_custom_call.1} parent=1 // pred_fallthru
      _
    // Predicated region
    $region66: #{tpu_custom_call.1} parent=1 // pred_check
      _
    $region67: #{tpu_custom_call.1} parent=1 // pred_check_branch
      %150 = sbr.rel (0) target = $region69
    $region68: #{tpu_custom_call.1} parent=1 // pred_region
      %151 = dma.done [#allocation6], 64
    $region69: #{tpu_custom_call.1} parent=1 // pred_fallthru
      _
    // Predicated region
    $region70: #{tpu_custom_call.1} parent=1 // pred_check
      _
    $region71: #{tpu_custom_call.1} parent=1 // pred_check_branch
      %153 = sbr.rel (0) target = $region73
    $region72: #{tpu_custom_call.1} parent=1 // pred_region
      %154 = dma.done [#allocation6], 64
    $region73: #{tpu_custom_call.1} parent=1 // pred_fallthru
      _
    // Predicated region
    $region74: #{tpu_custom_call.1} parent=1 // pred_check
      _
    $region75: #{tpu_custom_call.1} parent=1 // pred_check_branch
      %156 = sbr.rel (0) target = $region77
    $region76: #{tpu_custom_call.1} parent=1 // pred_region
      %157 = dma.done [#allocation9], 128
    $region77: #{tpu_custom_call.1} parent=1 // pred_fallthru
      _
    // Predicated region
    $region78: #{tpu_custom_call.1} parent=1 // pred_check
      _
    $region79: #{tpu_custom_call.1} parent=1 // pred_check_branch
      %159 = sbr.rel (0) target = $region81
    $region80: #{tpu_custom_call.1} parent=1 // pred_region
      %160 = dma.done [#allocation9], 32
    $region81: #{tpu_custom_call.1} parent=1 // pred_fallthru
      _
    // Predicated region
    $region82: #{tpu_custom_call.1} parent=1 // pred_check
      _
    $region83: #{tpu_custom_call.1} parent=1 // pred_check_branch
      %162 = sbr.rel (0) target = $region85
    $region84: #{tpu_custom_call.1} parent=1 // pred_region
      %163 = dma.done [#allocation12], 256
    $region85: #{tpu_custom_call.1} parent=1 // pred_fallthru
      _
    // Predicated region
    $region86: #{tpu_custom_call.1} parent=1 // pred_check
      _
    $region87: #{tpu_custom_call.1} parent=1 // pred_check_branch
      %165 = sbr.rel (0) target = $region89
    $region88: #{tpu_custom_call.1} parent=1 // pred_region
      %166 = dma.done [#allocation12], 256
    $region89: #{tpu_custom_call.1} parent=1 // pred_fallthru
      _
    // Predicated region
    $region90: #{tpu_custom_call.1} parent=1 // pred_check
      _
    $region91: #{tpu_custom_call.1} parent=1 // pred_check_branch
      %168 = sbr.rel (0) target = $region93
    $region92: #{tpu_custom_call.1} parent=1 // pred_region
      %169 = dma.done [#allocation15], 16
    $region93: #{tpu_custom_call.1} parent=1 // pred_fallthru
      _
    // Predicated region
    $region94: #{tpu_custom_call.1} parent=1 // pred_check
      _
    $region95: #{tpu_custom_call.1} parent=1 // pred_check_branch
      %171 = sbr.rel (0) target = $region97
    $region96: #{tpu_custom_call.1} parent=1 // pred_region
      %172 = dma.done [#allocation15], 256
    $region97: #{tpu_custom_call.1} parent=1 // pred_fallthru
      _
    %v174 = vld [vmem:[#allocation2] sm:$0x3]
    %s175 = scalar_lea.vmem [#allocation5], 2
    %v176 = vld [vmem:[%s175] sm:$0x3]
    %v177 = vpack.c.bf16 %v176, %v176
    %v178 = vld [vmem:[%s6] sm:$0xf]
    %v179 = vld [vmem:[%s6 + $0x4] sm:$0xf]
    %v180 = vld [vmem:[%s6 + $0x8] sm:$0xf]
    %v181 = vld [vmem:[%s6 + $0xc] sm:$0xf]
    %v186 = vunpack.c.l.b16 %v178
    %v187 = vunpack.c.l.b16 %v179
    %v188 = vunpack.c.l.b16 %v180
    %v189 = vunpack.c.l.b16 %v181
    %v190 = vpack.c.b16 %v187, %v186
    %v191 = vpack.c.b16 %v189, %v188
    %vm194 = vcmask 261120
    %v196 = vsel %vm194, %v177, 0
    %198 = vmatprep.subr.bf16.mxu0 0
    %199 = vmatpush1.bf16.msra.mxu0 %v190
    %200 = vmatprep.subr.bf16.mxu0 0
    %201 = vmatpush1.bf16.msra.mxu0 %v191
    %202 = vmatprep.subr.bf16.mxu0 0
    %203 = vmatpush1.bf16.msra.mxu0 0
    %204 = vmatprep.subr.bf16.mxu0 0
    %205 = vmatpush1.bf16.msra.mxu0 0
    %206 = vmatprep.subr.bf16.mxu0 0
    %207 = vmatpush1.bf16.msra.mxu0 0
    %208 = vmatprep.subr.bf16.mxu0 0
    %209 = vmatpush1.bf16.msra.mxu0 0
    %210 = vmatprep.subr.bf16.mxu0 0
    %211 = vmatpush1.bf16.msra.mxu0 0
    %212 = vmatprep.subr.bf16.mxu0 0
    %213 = vmatpush1.bf16.msra.mxu0 0
    %214 = vmatprep.subr.bf16.mxu0 0
    %215 = vmatpush1.bf16.msra.mxu0 0
    %216 = vmatprep.subr.bf16.mxu0 0
    %217 = vmatpush1.bf16.msra.mxu0 0
    %218 = vmatprep.subr.bf16.mxu0 0
    %219 = vmatpush1.bf16.msra.mxu0 0
    %220 = vmatprep.subr.bf16.mxu0 0
    %221 = vmatpush1.bf16.msra.mxu0 0
    %222 = vmatprep.subr.bf16.mxu0 0
    %223 = vmatpush1.bf16.msra.mxu0 0
    %224 = vmatprep.subr.bf16.mxu0 0
    %225 = vmatpush1.bf16.msra.mxu0 0
    %226 = vmatprep.subr.bf16.mxu0 0
    %227 = vmatpush1.bf16.msra.mxu0 0
    %228 = vmatprep.subr.bf16.mxu0 0
    %229 = vmatpush1.bf16.msra.mxu0 0
    %230 = vmatprep.mubr.bf16.mxu0 0
    %231 = vmatmul.mubr.bf16.gmra.mrb[0].mxu0 %v196
    %v232 = vpop.f32.mrb[0].mxu0
    %v233 = vadd.f32 0.0, %v232
    %v234 = vpop.f32.mrb[0].mxu0
    %v235 = vpop.f32.mrb[0].mxu0
    %v236 = vpop.f32.mrb[0].mxu0
    %237 = vdwg.mxu0
    %v240 = vunpack.c.l.s4 1966171168
    %v241 = vunpack.c.0.s8 %v240
    %v242 = vlaneseq
    %v243 = vshrl.u32 %v242, 7
    %v244 = vsub.s32 %v241, %v243
    %v245 = vrot.slane %v233, %v244
    %v246 = vcombine.high %v245, %v245
    %v248 = vunpack.c.l.s4 1966171168
    %v249 = vunpack.c.0.s8 %v248
    %v250 = vlaneseq
    %v251 = vshrl.u32 %v250, 7
    %v252 = vsub.s32 %v249, %v251
    %v253 = vrot.slane %v245, %v252
    %v255 = vunpack.c.l.s4 1966171168
    %v256 = vunpack.c.0.s8 %v255
    %v257 = vlaneseq
    %v258 = vshrl.u32 %v257, 7
    %v259 = vsub.s32 %v256, %v258
    %v260 = vrot.slane %v246, %v259
    %v261 = vlaneseq
    %v262 = vshrl.u32 %v261, 7
    %v263 = vsub.s32 0, %v262
    %v264 = vrot.slane %v253, %v263
    %v265 = vlaneseq
    %v266 = vshrl.u32 %v265, 7
    %v267 = vsub.s32 0, %v266
    %v268 = vrot.slane %v260, %v267
    %v271 = vld [vmem:[%s4] sm:$0xff]
    %v272 = vld [vmem:[%s4 + $0x8] sm:$0xff]
    %v273 = vadd.f32 %v271, %v264
    %v274 = vadd.f32 %v272, %v268
    %v275 = vtanh.pop %v273
    %v276 = vtanh.pop %v274
    %v277 = vld [vmem:[%s7] sm:$0x1]
    %v279 = vlaneseq
    %v280 = vshrl.u32 %v279, 7
    %v281 = vsub.s32 0, %v280
    %v282 = vrot.slane %v277, %v281
    %v284 = vmul.f32 %v275, %v282
    %v285 = vmul.f32 %v276, %v282
    %vm286 = vcmask 130048
    %v287 = vsel %vm286, %v284, 0.0
    %288 = vadd.xlane.f32.xlu0 %v287
    %v289 = vpop.xlane.xlu0 %288
    %v290 = vsel %vm286, %v285, 0.0
    %291 = vadd.xlane.f32.xlu0 %v290
    %v292 = vpop.xlane.xlu0 %291
    %v293 = vld [vmem:[#allocation10] sm:$0x3]
    %v295 = vlaneseq
    %v296 = vshrl.u32 %v295, 7
    %v297 = vsub.s32 0, %v296
    %v298 = vrot.slane %v293, %v297
    %300 = vbcast.lane.b32.xlu0 %v298, 256
    %v301 = vpop.permute.xlu0 %300
    %v302 = vlaneseq
    %v303 = vshrl.u32 %v302, 7
    %v304 = vsub.s32 1, %v303
    %v305 = vrot.slane %v293, %v304
    %307 = vbcast.lane.b32.xlu0 %v305, 256
    %v308 = vpop.permute.xlu0 %307
    %v311 = vadd.f32 %v289, %v301
    %v312 = vadd.f32 %v292, %v308
    %315 = vset.pattern.permute.xlu0 0
    %316 = vperm.xlu0 %315, %v311
    %v317 = vpop.permute.xlu0 %316
    %318 = vset.pattern.permute.xlu0 0
    %319 = vperm.xlu0 %318, %v312
    %v320 = vpop.permute.xlu0 %319
    %v321 = vlaneseq
    %v322 = vand.u32 %v321, 127
    %v323 = vlaneseq
    %v324 = vshrl.u32 %v323, 7
    %v325 = vsub.s32 %v322, %v324
    %v326 = vrot.slane %v317, %v325
    %v327 = vlaneseq
    %v328 = vshrl.u32 %v327, 7
    %v329 = vsub.s32 %v322, %v328
    %v330 = vrot.slane %v320, %v329
    %vm331 = vcmask 1041409
    %v332 = vsel %vm331, %v330, %v326
    %vm334 = vcmask 58368
    %v335 = vsel %vm334, %v332, -inf
    %336 = vmax.xlane.f32.xlu0 %v335
    %v337 = vpop.xlane.xlu0 %336
    %v339 = vlaneseq
    %v340 = vshrl.u32 %v339, 7
    %v341 = vsub.s32 0, %v340
    %v342 = vrot.slane %v337, %v341
    %v343 = vlaneseq
    %v344 = vshrl.u32 %v343, 7
    %v345 = vsub.s32 1, %v344
    %v346 = vrot.slane %v337, %v345
    %v349 = vsub.f32 %v311, %v342
    %v350 = vsub.f32 %v312, %v346
    %v351 = vmul.f32 %v349, 1.442695
    %v352 = vpow.pop %v351
    %v353 = vmul.f32 %v350, 1.442695
    %v354 = vpow.pop %v353
    %357 = vset.pattern.permute.xlu0 0
    %358 = vperm.xlu0 %357, %v352
    %v359 = vpop.permute.xlu0 %358
    %360 = vset.pattern.permute.xlu0 0
    %361 = vperm.xlu0 %360, %v354
    %v362 = vpop.permute.xlu0 %361
    %v363 = vlaneseq
    %v364 = vshrl.u32 %v363, 7
    %v365 = vsub.s32 %v322, %v364
    %v366 = vrot.slane %v359, %v365
    %v367 = vlaneseq
    %v368 = vshrl.u32 %v367, 7
    %v369 = vsub.s32 %v322, %v368
    %v370 = vrot.slane %v362, %v369
    %v371 = vsel %vm331, %v370, %v366
    %v373 = vsel %vm334, %v371, 0.0
    %374 = vadd.xlane.f32.xlu0 %v373
    %v375 = vpop.xlane.xlu0 %374
    %v376 = vrcp.pop %v375
    %v378 = vlaneseq
    %v379 = vshrl.u32 %v378, 7
    %v380 = vsub.s32 0, %v379
    %v381 = vrot.slane %v376, %v380
    %v382 = vlaneseq
    %v383 = vshrl.u32 %v382, 7
    %v384 = vsub.s32 1, %v383
    %v385 = vrot.slane %v376, %v384
    %v388 = vmul.f32 %v352, %v381
    %v389 = vmul.f32 %v354, %v385
    %392 = vset.pattern.permute.xlu0 0
    %393 = vperm.xlu0 %392, %v388
    %v394 = vpop.permute.xlu0 %393
    %395 = vset.pattern.permute.xlu0 0
    %396 = vperm.xlu0 %395, %v389
    %v397 = vpop.permute.xlu0 %396
    %v398 = vlaneseq
    %v399 = vshrl.u32 %v398, 7
    %v400 = vsub.s32 %v322, %v399
    %v401 = vrot.slane %v394, %v400
    %v402 = vlaneseq
    %v403 = vshrl.u32 %v402, 7
    %v404 = vsub.s32 %v322, %v403
    %v405 = vrot.slane %v397, %v404
    %v406 = vsel %vm331, %v405, %v401
    %408 = vst.msk [vmem:[#allocation20] sm:$0x3] %vm334, %v406
    %v409 = vpack.c.bf16 %v388, %v388
    %v410 = vld [vmem:[#allocation8] sm:$0xf]
    %v412 = vunpack.c.l.b16 %v409
    %413 = vset.pattern.permute.xlu0 0
    %414 = vperm.xlu0 %413, %v412
    %v415 = vpop.permute.xlu0 %414
    %v416 = vlaneseq
    %v417 = vshrl.u32 %v416, 7
    %v418 = vsub.s32 %v322, %v417
    %v419 = vrot.slane %v415, %v418
    %v420 = vpack.c.b16 %v419, %v419
    %vm421 = vcmask 64512
    %v423 = vsel %vm421, %v420, 0
    %vm425 = vcmask 1043456
    %v427 = vsel %vm425, %v410, 0
    %429 = vmatprep.subr.bf16.mxu0 0
    %430 = vmatpush1.bf16.msra.mxu0 %v427
    %431 = vmatprep.subr.bf16.mxu0 0
    %432 = vmatpush1.bf16.msra.mxu0 0
    %433 = vmatprep.subr.bf16.mxu0 0
    %434 = vmatpush1.bf16.msra.mxu0 0
    %435 = vmatprep.subr.bf16.mxu0 0
    %436 = vmatpush1.bf16.msra.mxu0 0
    %437 = vmatprep.subr.bf16.mxu0 0
    %438 = vmatpush1.bf16.msra.mxu0 0
    %439 = vmatprep.subr.bf16.mxu0 0
    %440 = vmatpush1.bf16.msra.mxu0 0
    %441 = vmatprep.subr.bf16.mxu0 0
    %442 = vmatpush1.bf16.msra.mxu0 0
    %443 = vmatprep.subr.bf16.mxu0 0
    %444 = vmatpush1.bf16.msra.mxu0 0
    %445 = vmatprep.subr.bf16.mxu0 0
    %446 = vmatpush1.bf16.msra.mxu0 0
    %447 = vmatprep.subr.bf16.mxu0 0
    %448 = vmatpush1.bf16.msra.mxu0 0
    %449 = vmatprep.subr.bf16.mxu0 0
    %450 = vmatpush1.bf16.msra.mxu0 0
    %451 = vmatprep.subr.bf16.mxu0 0
    %452 = vmatpush1.bf16.msra.mxu0 0
    %453 = vmatprep.subr.bf16.mxu0 0
    %454 = vmatpush1.bf16.msra.mxu0 0
    %455 = vmatprep.subr.bf16.mxu0 0
    %456 = vmatpush1.bf16.msra.mxu0 0
    %457 = vmatprep.subr.bf16.mxu0 0
    %458 = vmatpush1.bf16.msra.mxu0 0
    %459 = vmatprep.subr.bf16.mxu0 0
    %460 = vmatpush1.bf16.msra.mxu0 0
    %461 = vmatprep.mubr.bf16.mxu0 0
    %462 = vmatmul.mubr.bf16.gmra.mrb[0].mxu0 %v423
    %v463 = vpop.f32.mrb[0].mxu0
    %v464 = vadd.f32 0.0, %v463
    %v465 = vpop.f32.mrb[0].mxu0
    %v466 = vpop.f32.mrb[0].mxu0
    %v467 = vpop.f32.mrb[0].mxu0
    %468 = vdwg.mxu0
    %v469 = vpack.c.bf16 %v389, %v389
    %s470 = scalar_lea.vmem [#allocation8], 4
    %v471 = vld [vmem:[%s470] sm:$0xf]
    %v473 = vunpack.c.l.b16 %v469
    %474 = vset.pattern.permute.xlu0 0
    %475 = vperm.xlu0 %474, %v473
    %v476 = vpop.permute.xlu0 %475
    %v477 = vlaneseq
    %v478 = vshrl.u32 %v477, 7
    %v479 = vsub.s32 %v322, %v478
    %v480 = vrot.slane %v476, %v479
    %v481 = vpack.c.b16 %v480, %v480
    %v483 = vsel %vm421, %v481, 0
    %v486 = vsel %vm425, %v471, 0
    %488 = vmatprep.subr.bf16.mxu0 0
    %489 = vmatpush1.bf16.msra.mxu0 %v486
    %490 = vmatprep.subr.bf16.mxu0 0
    %491 = vmatpush1.bf16.msra.mxu0 0
    %492 = vmatprep.subr.bf16.mxu0 0
    %493 = vmatpush1.bf16.msra.mxu0 0
    %494 = vmatprep.subr.bf16.mxu0 0
    %495 = vmatpush1.bf16.msra.mxu0 0
    %496 = vmatprep.subr.bf16.mxu0 0
    %497 = vmatpush1.bf16.msra.mxu0 0
    %498 = vmatprep.subr.bf16.mxu0 0
    %499 = vmatpush1.bf16.msra.mxu0 0
    %500 = vmatprep.subr.bf16.mxu0 0
    %501 = vmatpush1.bf16.msra.mxu0 0
    %502 = vmatprep.subr.bf16.mxu0 0
    %503 = vmatpush1.bf16.msra.mxu0 0
    %504 = vmatprep.subr.bf16.mxu0 0
    %505 = vmatpush1.bf16.msra.mxu0 0
    %506 = vmatprep.subr.bf16.mxu0 0
    %507 = vmatpush1.bf16.msra.mxu0 0
    %508 = vmatprep.subr.bf16.mxu0 0
    %509 = vmatpush1.bf16.msra.mxu0 0
    %510 = vmatprep.subr.bf16.mxu0 0
    %511 = vmatpush1.bf16.msra.mxu0 0
    %512 = vmatprep.subr.bf16.mxu0 0
    %513 = vmatpush1.bf16.msra.mxu0 0
    %514 = vmatprep.subr.bf16.mxu0 0
    %515 = vmatpush1.bf16.msra.mxu0 0
    %516 = vmatprep.subr.bf16.mxu0 0
    %517 = vmatpush1.bf16.msra.mxu0 0
    %518 = vmatprep.subr.bf16.mxu0 0
    %519 = vmatpush1.bf16.msra.mxu0 0
    %520 = vmatprep.mubr.bf16.mxu0 0
    %521 = vmatmul.mubr.bf16.gmra.mrb[0].mxu0 %v483
    %v522 = vpop.f32.mrb[0].mxu0
    %v523 = vadd.f32 0.0, %v522
    %v524 = vpop.f32.mrb[0].mxu0
    %v525 = vpop.f32.mrb[0].mxu0
    %v526 = vpop.f32.mrb[0].mxu0
    %527 = vdwg.mxu0
    %v529 = vrot.slane %v523, 7
    %vm531 = vcmask 1040384
    %v532 = vsel %vm531, %v464, %v529
    %vm533 = vcmask 517120
    %534 = vst.msk [vmem:[#allocation21] sm:$0x3] %vm533, %v532
    %v535 = vpack.c.bf16 %v532, %v532
    %v536 = vld [vmem:[#allocation5] sm:$0x3]
    %v537 = vld [vmem:[#allocation7] sm:$0x3]
    %v538 = vpack.c.bf16 %v174, %v174
    %v539 = vld [vmem:[#allocation11] sm:$0xf]
    %v540 = vld [vmem:[#allocation11 + $0x4] sm:$0xf]
    %v541 = vld [vmem:[#allocation11 + $0x8] sm:$0xf]
    %v542 = vld [vmem:[#allocation11 + $0xc] sm:$0xf]
    %v543 = vld [vmem:[%s9] sm:$0xf]
    %v544 = vld [vmem:[%s9 + $0x4] sm:$0xf]
    %v545 = vld [vmem:[%s9 + $0x8] sm:$0xf]
    %v546 = vld [vmem:[%s9 + $0xc] sm:$0xf]
    %v547 = vld [vmem:[%s9 + $0x10] sm:$0xf]
    %v548 = vld [vmem:[%s9 + $0x14] sm:$0xf]
    %v549 = vld [vmem:[%s9 + $0x18] sm:$0xf]
    %v550 = vld [vmem:[%s9 + $0x1c] sm:$0xf]
    %v559 = vunpack.c.l.b16 %v543
    %v560 = vunpack.c.l.b16 %v544
    %v561 = vunpack.c.l.b16 %v545
    %v562 = vunpack.c.l.b16 %v546
    %v563 = vunpack.c.l.b16 %v547
    %v564 = vunpack.c.l.b16 %v548
    %v565 = vunpack.c.l.b16 %v549
    %v566 = vunpack.c.l.b16 %v550
    %v567 = vpack.c.b16 %v560, %v559
    %v568 = vpack.c.b16 %v562, %v561
    %v569 = vpack.c.b16 %v564, %v563
    %v570 = vpack.c.b16 %v566, %v565
    %vm575 = vcmask 523264
    %v577 = vsel %vm575, %v535, 0
    %579 = vmatprep.subr.bf16.mxu0 0
    %580 = vmatpush1.bf16.msra.mxu0 %v567
    %581 = vmatprep.subr.bf16.mxu0 0
    %582 = vmatpush1.bf16.msra.mxu0 %v568
    %583 = vmatprep.subr.bf16.mxu0 0
    %584 = vmatpush1.bf16.msra.mxu0 %v569
    %585 = vmatprep.subr.bf16.mxu0 0
    %586 = vmatpush1.bf16.msra.mxu0 %v570
    %587 = vmatprep.subr.bf16.mxu0 0
    %588 = vmatpush1.bf16.msra.mxu0 0
    %589 = vmatprep.subr.bf16.mxu0 0
    %590 = vmatpush1.bf16.msra.mxu0 0
    %591 = vmatprep.subr.bf16.mxu0 0
    %592 = vmatpush1.bf16.msra.mxu0 0
    %593 = vmatprep.subr.bf16.mxu0 0
    %594 = vmatpush1.bf16.msra.mxu0 0
    %595 = vmatprep.subr.bf16.mxu0 0
    %596 = vmatpush1.bf16.msra.mxu0 0
    %597 = vmatprep.subr.bf16.mxu0 0
    %598 = vmatpush1.bf16.msra.mxu0 0
    %599 = vmatprep.subr.bf16.mxu0 0
    %600 = vmatpush1.bf16.msra.mxu0 0
    %601 = vmatprep.subr.bf16.mxu0 0
    %602 = vmatpush1.bf16.msra.mxu0 0
    %603 = vmatprep.subr.bf16.mxu0 0
    %604 = vmatpush1.bf16.msra.mxu0 0
    %605 = vmatprep.subr.bf16.mxu0 0
    %606 = vmatpush1.bf16.msra.mxu0 0
    %607 = vmatprep.subr.bf16.mxu0 0
    %608 = vmatpush1.bf16.msra.mxu0 0
    %609 = vmatprep.subr.bf16.mxu0 0
    %610 = vmatpush1.bf16.msra.mxu0 0
    %611 = vmatprep.mubr.bf16.mxu0 0
    %612 = vmatmul.mubr.bf16.gmra.mrb[0].mxu0 %v577
    %v613 = vpop.f32.mrb[0].mxu0
    %v614 = vadd.f32 0.0, %v613
    %v615 = vpop.f32.mrb[0].mxu0
    %v616 = vpop.f32.mrb[0].mxu0
    %v617 = vpop.f32.mrb[0].mxu0
    %618 = vdwg.mxu0
    %v623 = vunpack.c.l.b16 %v539
    %v624 = vunpack.c.l.b16 %v540
    %v625 = vunpack.c.l.b16 %v541
    %v626 = vunpack.c.l.b16 %v542
    %v627 = vpack.c.b16 %v624, %v623
    %v628 = vpack.c.b16 %v626, %v625
    %v632 = vsel %vm194, %v538, 0
    %634 = vmatprep.subr.bf16.mxu0 0
    %635 = vmatpush1.bf16.msra.mxu0 %v627
    %636 = vmatprep.subr.bf16.mxu0 0
    %637 = vmatpush1.bf16.msra.mxu0 %v628
    %638 = vmatprep.subr.bf16.mxu0 0
    %639 = vmatpush1.bf16.msra.mxu0 0
    %640 = vmatprep.subr.bf16.mxu0 0
    %641 = vmatpush1.bf16.msra.mxu0 0
    %642 = vmatprep.subr.bf16.mxu0 0
    %643 = vmatpush1.bf16.msra.mxu0 0
    %644 = vmatprep.subr.bf16.mxu0 0
    %645 = vmatpush1.bf16.msra.mxu0 0
    %646 = vmatprep.subr.bf16.mxu0 0
    %647 = vmatpush1.bf16.msra.mxu0 0
    %648 = vmatprep.subr.bf16.mxu0 0
    %649 = vmatpush1.bf16.msra.mxu0 0
    %650 = vmatprep.subr.bf16.mxu0 0
    %651 = vmatpush1.bf16.msra.mxu0 0
    %652 = vmatprep.subr.bf16.mxu0 0
    %653 = vmatpush1.bf16.msra.mxu0 0
    %654 = vmatprep.subr.bf16.mxu0 0
    %655 = vmatpush1.bf16.msra.mxu0 0
    %656 = vmatprep.subr.bf16.mxu0 0
    %657 = vmatpush1.bf16.msra.mxu0 0
    %658 = vmatprep.subr.bf16.mxu0 0
    %659 = vmatpush1.bf16.msra.mxu0 0
    %660 = vmatprep.subr.bf16.mxu0 0
    %661 = vmatpush1.bf16.msra.mxu0 0
    %662 = vmatprep.subr.bf16.mxu0 0
    %663 = vmatpush1.bf16.msra.mxu0 0
    %664 = vmatprep.subr.bf16.mxu0 0
    %665 = vmatpush1.bf16.msra.mxu0 0
    %666 = vmatprep.mubr.bf16.mxu0 0
    %667 = vmatmul.mubr.bf16.gmra.mrb[0].mxu0 %v632
    %v668 = vpop.f32.mrb[0].mxu0
    %v669 = vadd.f32 %v614, %v668
    %v670 = vpop.f32.mrb[0].mxu0
    %v671 = vpop.f32.mrb[0].mxu0
    %v672 = vpop.f32.mrb[0].mxu0
    %673 = vdwg.mxu0
    %v674 = vpack.c.bf16 %v536, %v536
    %v675 = vld [vmem:[#allocation13] sm:$0xf]
    %v676 = vld [vmem:[#allocation13 + $0x4] sm:$0xf]
    %v677 = vld [vmem:[#allocation13 + $0x8] sm:$0xf]
    %v678 = vld [vmem:[#allocation13 + $0xc] sm:$0xf]
    %v683 = vunpack.c.l.b16 %v675
    %v684 = vunpack.c.l.b16 %v676
    %v685 = vunpack.c.l.b16 %v677
    %v686 = vunpack.c.l.b16 %v678
    %v687 = vpack.c.b16 %v684, %v683
    %v688 = vpack.c.b16 %v686, %v685
    %v692 = vsel %vm194, %v674, 0
    %694 = vmatprep.subr.bf16.mxu0 0
    %695 = vmatpush1.bf16.msra.mxu0 %v687
    %696 = vmatprep.subr.bf16.mxu0 0
    %697 = vmatpush1.bf16.msra.mxu0 %v688
    %698 = vmatprep.subr.bf16.mxu0 0
    %699 = vmatpush1.bf16.msra.mxu0 0
    %700 = vmatprep.subr.bf16.mxu0 0
    %701 = vmatpush1.bf16.msra.mxu0 0
    %702 = vmatprep.subr.bf16.mxu0 0
    %703 = vmatpush1.bf16.msra.mxu0 0
    %704 = vmatprep.subr.bf16.mxu0 0
    %705 = vmatpush1.bf16.msra.mxu0 0
    %706 = vmatprep.subr.bf16.mxu0 0
    %707 = vmatpush1.bf16.msra.mxu0 0
    %708 = vmatprep.subr.bf16.mxu0 0
    %709 = vmatpush1.bf16.msra.mxu0 0
    %710 = vmatprep.subr.bf16.mxu0 0
    %711 = vmatpush1.bf16.msra.mxu0 0
    %712 = vmatprep.subr.bf16.mxu0 0
    %713 = vmatpush1.bf16.msra.mxu0 0
    %714 = vmatprep.subr.bf16.mxu0 0
    %715 = vmatpush1.bf16.msra.mxu0 0
    %716 = vmatprep.subr.bf16.mxu0 0
    %717 = vmatpush1.bf16.msra.mxu0 0
    %718 = vmatprep.subr.bf16.mxu0 0
    %719 = vmatpush1.bf16.msra.mxu0 0
    %720 = vmatprep.subr.bf16.mxu0 0
    %721 = vmatpush1.bf16.msra.mxu0 0
    %722 = vmatprep.subr.bf16.mxu0 0
    %723 = vmatpush1.bf16.msra.mxu0 0
    %724 = vmatprep.subr.bf16.mxu0 0
    %725 = vmatpush1.bf16.msra.mxu0 0
    %726 = vmatprep.mubr.bf16.mxu0 0
    %727 = vmatmul.mubr.bf16.gmra.mrb[0].mxu0 %v692
    %v728 = vpop.f32.mrb[0].mxu0
    %v729 = vadd.f32 0.0, %v728
    %v730 = vpop.f32.mrb[0].mxu0
    %v731 = vpop.f32.mrb[0].mxu0
    %v732 = vpop.f32.mrb[0].mxu0
    %733 = vdwg.mxu0
    %v734 = vadd.f32 %v669, %v729
    %v735 = vld [vmem:[#allocation14] sm:$0x1]
    %v737 = vlaneseq
    %v738 = vshrl.u32 %v737, 7
    %v739 = vsub.s32 0, %v738
    %v740 = vrot.slane %v735, %v739
    %v742 = vadd.f32 %v734, %v740
    %v743 = vxor.u32 %v742, 2147483648
    %v744 = vmul.f32 %v743, 1.442695
    %v745 = vpow.pop %v744
    %v746 = vadd.f32 %v745, 1.0
    %v747 = vrcp.pop %v746
    %v748 = vmul.f32 1.0, %v747
    %v749 = vtanh.pop %v742
    %751 = vrot.lane.b32.xlu0 %v537, 32
    %v752 = vpop.permute.xlu0 %751
    %v754 = vmul.f32 %v748, %v752
    %756 = vrot.lane.b32.xlu0 %v749, 64
    %v757 = vpop.permute.xlu0 %756
    %v759 = vmul.f32 %v748, %v757
    %761 = vrot.lane.b32.xlu0 %v759, 32
    %v762 = vpop.permute.xlu0 %761
    %v764 = vadd.f32 %v754, %v762
    %v765 = vtanh.pop %v764
    %767 = vrot.lane.b32.xlu0 %v765, 64
    %v768 = vpop.permute.xlu0 %767
    %v770 = vmul.f32 %v748, %v768
    %772 = vrot.lane.b32.xlu0 %v770, 32
    %v773 = vpop.permute.xlu0 %772
    %vm775 = vcmask 254976
    %776 = vst.msk [vmem:[#allocation17] sm:$0x3] %vm775, %v773
    %778 = vrot.lane.b32.xlu0 %v764, 96
    %v779 = vpop.permute.xlu0 %778
    %781 = vst.msk [vmem:[#allocation18] sm:$0x3] %vm775, %v779
    %v782 = vld [vmem:[%s175] sm:$0x3]
    %s783 = scalar_lea.vmem [#allocation7], 2
    %v784 = vld [vmem:[%s783] sm:$0x3]
    %v785 = vpack.c.bf16 %v770, %v770
    %v786 = vld [vmem:[%s12] sm:$0xf]
    %v787 = vld [vmem:[%s12 + $0x4] sm:$0xf]
    %v788 = vld [vmem:[%s12 + $0x8] sm:$0xf]
    %v789 = vld [vmem:[%s12 + $0xc] sm:$0xf]
    %v790 = vpack.c.bf16 %v782, %v782
    %v791 = vld [vmem:[#allocation16] sm:$0xf]
    %v792 = vld [vmem:[#allocation16 + $0x4] sm:$0xf]
    %v793 = vld [vmem:[#allocation16 + $0x8] sm:$0xf]
    %v794 = vld [vmem:[#allocation16 + $0xc] sm:$0xf]
    %v799 = vunpack.c.l.b16 %v791
    %v800 = vunpack.c.l.b16 %v792
    %v801 = vunpack.c.l.b16 %v793
    %v802 = vunpack.c.l.b16 %v794
    %v803 = vpack.c.b16 %v800, %v799
    %v804 = vpack.c.b16 %v802, %v801
    %v808 = vsel %vm194, %v790, 0
    %810 = vmatprep.subr.bf16.mxu0 0
    %811 = vmatpush1.bf16.msra.mxu0 %v803
    %812 = vmatprep.subr.bf16.mxu0 0
    %813 = vmatpush1.bf16.msra.mxu0 %v804
    %814 = vmatprep.subr.bf16.mxu0 0
    %815 = vmatpush1.bf16.msra.mxu0 0
    %816 = vmatprep.subr.bf16.mxu0 0
    %817 = vmatpush1.bf16.msra.mxu0 0
    %818 = vmatprep.subr.bf16.mxu0 0
    %819 = vmatpush1.bf16.msra.mxu0 0
    %820 = vmatprep.subr.bf16.mxu0 0
    %821 = vmatpush1.bf16.msra.mxu0 0
    %822 = vmatprep.subr.bf16.mxu0 0
    %823 = vmatpush1.bf16.msra.mxu0 0
    %824 = vmatprep.subr.bf16.mxu0 0
    %825 = vmatpush1.bf16.msra.mxu0 0
    %826 = vmatprep.subr.bf16.mxu0 0
    %827 = vmatpush1.bf16.msra.mxu0 0
    %828 = vmatprep.subr.bf16.mxu0 0
    %829 = vmatpush1.bf16.msra.mxu0 0
    %830 = vmatprep.subr.bf16.mxu0 0
    %831 = vmatpush1.bf16.msra.mxu0 0
    %832 = vmatprep.subr.bf16.mxu0 0
    %833 = vmatpush1.bf16.msra.mxu0 0
    %834 = vmatprep.subr.bf16.mxu0 0
    %835 = vmatpush1.bf16.msra.mxu0 0
    %836 = vmatprep.subr.bf16.mxu0 0
    %837 = vmatpush1.bf16.msra.mxu0 0
    %838 = vmatprep.subr.bf16.mxu0 0
    %839 = vmatpush1.bf16.msra.mxu0 0
    %840 = vmatprep.subr.bf16.mxu0 0
    %841 = vmatpush1.bf16.msra.mxu0 0
    %842 = vmatprep.mubr.bf16.mxu0 0
    %843 = vmatmul.mubr.bf16.gmra.mrb[0].mxu0 %v808
    %v844 = vpop.f32.mrb[0].mxu0
    %v845 = vadd.f32 0.0, %v844
    %v846 = vpop.f32.mrb[0].mxu0
    %v847 = vpop.f32.mrb[0].mxu0
    %v848 = vpop.f32.mrb[0].mxu0
    %849 = vdwg.mxu0
    %851 = vrot.lane.b32.xlu0 %v785, 32
    %v852 = vpop.permute.xlu0 %851
    %v857 = vunpack.c.l.b16 %v786
    %v858 = vunpack.c.l.b16 %v787
    %v859 = vunpack.c.l.b16 %v788
    %v860 = vunpack.c.l.b16 %v789
    %v861 = vpack.c.b16 %v858, %v857
    %v862 = vpack.c.b16 %v860, %v859
    %v866 = vsel %vm194, %v852, 0
    %868 = vmatprep.subr.bf16.mxu0 0
    %869 = vmatpush1.bf16.msra.mxu0 %v861
    %870 = vmatprep.subr.bf16.mxu0 0
    %871 = vmatpush1.bf16.msra.mxu0 %v862
    %872 = vmatprep.subr.bf16.mxu0 0
    %873 = vmatpush1.bf16.msra.mxu0 0
    %874 = vmatprep.subr.bf16.mxu0 0
    %875 = vmatpush1.bf16.msra.mxu0 0
    %876 = vmatprep.subr.bf16.mxu0 0
    %877 = vmatpush1.bf16.msra.mxu0 0
    %878 = vmatprep.subr.bf16.mxu0 0
    %879 = vmatpush1.bf16.msra.mxu0 0
    %880 = vmatprep.subr.bf16.mxu0 0
    %881 = vmatpush1.bf16.msra.mxu0 0
    %882 = vmatprep.subr.bf16.mxu0 0
    %883 = vmatpush1.bf16.msra.mxu0 0
    %884 = vmatprep.subr.bf16.mxu0 0
    %885 = vmatpush1.bf16.msra.mxu0 0
    %886 = vmatprep.subr.bf16.mxu0 0
    %887 = vmatpush1.bf16.msra.mxu0 0
    %888 = vmatprep.subr.bf16.mxu0 0
    %889 = vmatpush1.bf16.msra.mxu0 0
    %890 = vmatprep.subr.bf16.mxu0 0
    %891 = vmatpush1.bf16.msra.mxu0 0
    %892 = vmatprep.subr.bf16.mxu0 0
    %893 = vmatpush1.bf16.msra.mxu0 0
    %894 = vmatprep.subr.bf16.mxu0 0
    %895 = vmatpush1.bf16.msra.mxu0 0
    %896 = vmatprep.subr.bf16.mxu0 0
    %897 = vmatpush1.bf16.msra.mxu0 0
    %898 = vmatprep.subr.bf16.mxu0 0
    %899 = vmatpush1.bf16.msra.mxu0 0
    %900 = vmatprep.mubr.bf16.mxu0 0
    %901 = vmatmul.mubr.bf16.gmra.mrb[0].mxu0 %v866
    %v902 = vpop.f32.mrb[0].mxu0
    %v903 = vadd.f32 %v845, %v902
    %v904 = vpop.f32.mrb[0].mxu0
    %v905 = vpop.f32.mrb[0].mxu0
    %v906 = vpop.f32.mrb[0].mxu0
    %907 = vdwg.mxu0
    %v908 = vld [vmem:[%s14] sm:$0x1]
    %v910 = vlaneseq
    %v911 = vshrl.u32 %v910, 7
    %v912 = vsub.s32 0, %v911
    %v913 = vrot.slane %v908, %v912
    %v915 = vadd.f32 %v903, %v913
    %v916 = vxor.u32 %v915, 2147483648
    %v917 = vmul.f32 %v916, 1.442695
    %v918 = vpow.pop %v917
    %v919 = vadd.f32 %v918, 1.0
    %v920 = vrcp.pop %v919
    %v921 = vmul.f32 1.0, %v920
    %v922 = vtanh.pop %v915
    %924 = vrot.lane.b32.xlu0 %v784, 32
    %v925 = vpop.permute.xlu0 %924
    %v927 = vmul.f32 %v921, %v925
    %929 = vrot.lane.b32.xlu0 %v922, 64
    %v930 = vpop.permute.xlu0 %929
    %v932 = vmul.f32 %v921, %v930
    %934 = vrot.lane.b32.xlu0 %v932, 32
    %v935 = vpop.permute.xlu0 %934
    %v937 = vadd.f32 %v927, %v935
    %v938 = vtanh.pop %v937
    %940 = vrot.lane.b32.xlu0 %v938, 64
    %v941 = vpop.permute.xlu0 %940
    %v943 = vmul.f32 %v921, %v941
    %945 = vrot.lane.b32.xlu0 %v943, 32
    %v946 = vpop.permute.xlu0 %945
    %s948 = scalar_lea.vmem [#allocation17], 2
    %949 = vst.msk [vmem:[%s948] sm:$0x3] %vm775, %v946
    %951 = vrot.lane.b32.xlu0 %v937, 96
    %v952 = vpop.permute.xlu0 %951
    %s954 = scalar_lea.vmem [#allocation18], 2
    %955 = vst.msk [vmem:[%s954] sm:$0x3] %vm775, %v952
    // Predicated region
    $region98: #{tpu_custom_call.1} parent=1 // pred_check
      _
    $region99: #{tpu_custom_call.1} parent=1 // pred_check_branch
      %957 = sbr.rel (0) target = $region101
    $region100: #{tpu_custom_call.1} parent=1 // pred_region
      %s959 = ssub.s32 64, 64
      %960 = vsyncadd [#allocation4], %s959
      %s961 = sshll.u32 [#allocation17], 4
      %s962 = int_to_ptr.vmem [resolvable:$true] %s961
      %967 = dma.vmem_to_hbm [thread:$0]  %s962, 64, %s15, [#allocation4], 32, 32, 2
    $region101: #{tpu_custom_call.1} parent=1 // pred_fallthru
      _
    // Predicated region
    $region102: #{tpu_custom_call.1} parent=1 // pred_check
      _
    $region103: #{tpu_custom_call.1} parent=1 // pred_check_branch
      %969 = sbr.rel (0) target = $region105
    $region104: #{tpu_custom_call.1} parent=1 // pred_region
      %s971 = ssub.s32 64, 64
      %972 = vsyncadd [#allocation19], %s971
      %s973 = sshll.u32 [#allocation18], 4
      %s974 = int_to_ptr.vmem [resolvable:$true] %s973
      %979 = dma.vmem_to_hbm [thread:$0]  %s974, 64, %s16, [#allocation19], 32, 32, 2
    $region105: #{tpu_custom_call.1} parent=1 // pred_fallthru
      _
    // Predicated region
    $region106: #{tpu_custom_call.1} parent=1 // pred_check
      _
    $region107: #{tpu_custom_call.1} parent=1 // pred_check_branch
      %981 = sbr.rel (0) target = $region109
    $region108: #{tpu_custom_call.1} parent=1 // pred_region
      %s983 = ssub.s32 32, 32
      %984 = vsyncadd [#allocation19], %s983
      %s986 = sshll.u32 [#allocation20], 4
      %s987 = int_to_ptr.vmem [resolvable:$true] %s986
      %989 = dma.vmem_to_hbm [thread:$0]  %s987, 32, %s17, [#allocation19]
    $region109: #{tpu_custom_call.1} parent=1 // pred_fallthru
      _
    // Predicated region
    $region110: #{tpu_custom_call.1} parent=1 // pred_check
      _
    $region111: #{tpu_custom_call.1} parent=1 // pred_check_branch
      %991 = sbr.rel (0) target = $region113
    $region112: #{tpu_custom_call.1} parent=1 // pred_region
      %s993 = ssub.s32 32, 32
      %994 = vsyncadd [#allocation22], %s993
      %s996 = sshll.u32 [#allocation21], 4
      %s997 = int_to_ptr.vmem [resolvable:$true] %s996
      %999 = dma.vmem_to_hbm [thread:$0]  %s997, 32, %s18, [#allocation22]
    $region113: #{tpu_custom_call.1} parent=1 // pred_fallthru
      _
    // Predicated region
    $region114: #{tpu_custom_call.1} parent=1 // pred_check
      _
    $region115: #{tpu_custom_call.1} parent=1 // pred_check_branch
      %1001 = sbr.rel (0) target = $region117
    $region116: #{tpu_custom_call.1} parent=1 // pred_region
      %1002 = dma.done [#allocation4], 64
    $region117: #{tpu_custom_call.1} parent=1 // pred_fallthru
      _
    // Predicated region
    $region118: #{tpu_custom_call.1} parent=1 // pred_check
      _
    $region119: #{tpu_custom_call.1} parent=1 // pred_check_branch
      %1004 = sbr.rel (0) target = $region121
    $region120: #{tpu_custom_call.1} parent=1 // pred_region
      %1005 = dma.done [#allocation19], 64
    $region121: #{tpu_custom_call.1} parent=1 // pred_fallthru
      _
    // Predicated region
    $region122: #{tpu_custom_call.1} parent=1 // pred_check
      _
    $region123: #{tpu_custom_call.1} parent=1 // pred_check_branch
      %1007 = sbr.rel (0) target = $region125
    $region124: #{tpu_custom_call.1} parent=1 // pred_region
      %1008 = dma.done [#allocation19], 32
    $region125: #{tpu_custom_call.1} parent=1 // pred_fallthru
      _
    // Predicated region
    $region126: #{tpu_custom_call.1} parent=1 // pred_check
      _
    $region127: #{tpu_custom_call.1} parent=1 // pred_check_branch
      %1010 = sbr.rel (0) target = $region129
    $region128: #{tpu_custom_call.1} parent=1 // pred_region
      %1011 = dma.done [#allocation22], 32
    $region129: #{tpu_custom_call.1} parent=1 // pred_fallthru
      _
    %1012 = vsyncpa [#allocation3], 1
    %1013 = vsyncpa [#allocation6], 1
    %1014 = vsyncpa [#allocation9], 1
    %1015 = vsyncpa [#allocation12], 1
    %1016 = vsyncpa [#allocation15], 1
    %1017 = vsyncpa [#allocation4], 1
    %1018 = vsyncpa [#allocation19], 1
    %1019 = vsyncpa [#allocation22], 1

</llo_original>
